<compile_context>
chip_gen: v6e
topology: v6e:2x2x1
jax: 0.10.0
libtpu: 0.0.40
codegen_flags: <defaults>
</compile_context>

<pallas_src>
import jax
import jax.numpy as jnp
from jax import lax
from jax.experimental import pallas as pl
from jax.experimental.pallas import tpu as pltpu


def _make_fused_kernel(N, Cin, Cout, H, W, pad, eps):
    """Fused conv3x3 + batch-stats + BatchNorm + ReLU kernel body."""
    HW = H * W

    def kernel(x_ref, w_ref, m_ref, g_ref, b_ref, o_ref, sum_ref, ssq_ref):
        n = pl.program_id(0)

        @pl.when(n == 0)
        def _init():
            sum_ref[...] = jnp.zeros_like(sum_ref)
            ssq_ref[...] = jnp.zeros_like(ssq_ref)

        # Column-validity masks (1.0 / 0.0), broadcast along sublanes.
        mask_l = m_ref[0:1, :]   # valid where w >= 1      (for dx = -1 taps)
        mask_r = m_ref[1:2, :]   # valid where w <= W - 2  (for dx = +1 taps)

        # 9 accumulating taps: each tap is a static lane-offset slice of the
        # 1-D zero-padded row (the halo already zeroes out-of-range rows; the
        # masks zero the row-wrap elements of the +-1 column shifts).
        acc = jnp.zeros((Cout, HW), jnp.float32)
        t = 0
        for dy in (-1, 0, 1):
            for dx in (-1, 0, 1):
                start = pad + dy * W + dx
                tap = x_ref[0, :, start:start + HW]          # (Cin, HW)
                if dx == 1:
                    tap = tap * mask_r
                elif dx == -1:
                    tap = tap * mask_l
                acc = acc + jnp.dot(w_ref[t], tap,
                                    preferred_element_type=jnp.float32)
                t += 1

        # Write this image's conv result into the resident output block and
        # accumulate per-channel statistics for training-mode BatchNorm.
        o_ref[n] = acc                                        # lane-dense store
        sum_ref[...] += jnp.sum(acc, axis=1, keepdims=True)   # (Cout, 1)
        ssq_ref[...] += jnp.sum(acc * acc, axis=1, keepdims=True)

        @pl.when(n == pl.num_programs(0) - 1)
        def _finalize():
            inv_cnt = 1.0 / float(N * HW)
            mean = sum_ref[...] * inv_cnt                     # (Cout, 1)
            var = ssq_ref[...] * inv_cnt - mean * mean        # biased (train BN)
            scale = g_ref[...] * lax.rsqrt(var + eps)         # (Cout, 1)
            shift = b_ref[...] - mean * scale
            y = o_ref[...] * scale[None, :, :] + shift[None, :, :]
            o_ref[...] = jnp.maximum(y, 0.0)                  # single HBM write

    return kernel


def conv3x3_forward(x_nchw, w_oihw, gamma, beta, eps=1e-5):
    """Forward pass of the PyTorch conv3x3 module (training-mode BatchNorm)."""
    N, Cin, H, W = x_nchw.shape
    Cout = w_oihw.shape[0]
    HW = H * W
    pad = W + 1                    # covers the max tap offset |dy*W + dx| = W+1
    HWP = HW + 2 * pad

    # Flatten spatial to one lane-dense axis (pure metadata) and add the small
    # 1-D zero halo so every conv tap is a static lane-offset slice in-kernel.
    xpad = jnp.pad(x_nchw.reshape(N, Cin, HW), ((0, 0), (0, 0), (pad, pad)))

    # (Cout, Cin, 3, 3) -> (3, 3, Cout, Cin) -> (9, Cout, Cin): tap-major, so
    # the kernel grabs one clean (Cout, Cin) block per tap (no lane slicing).
    wtaps = jnp.transpose(w_oihw, (2, 3, 0, 1)).reshape(9, Cout, Cin)
    wtaps = wtaps.astype(jnp.float32)

    # Column-validity masks for the +-1 column shifts (kill row-wrap lanes).
    col = jnp.arange(HW, dtype=jnp.int32) % W
    masks = jnp.stack([(col >= 1).astype(jnp.float32),
                       (col <= W - 2).astype(jnp.float32)], axis=0)  # (2, HW)

    kernel = _make_fused_kernel(N, Cin, Cout, H, W, pad, eps)

    out = pl.pallas_call(
        kernel,
        out_shape=jax.ShapeDtypeStruct((N, Cout, HW), jnp.float32),
        grid=(N,),
        in_specs=[
            pl.BlockSpec((1, Cin, HWP), lambda n: (n, 0, 0)),   # per-image input
            pl.BlockSpec((9, Cout, Cin), lambda n: (0, 0, 0)),  # weights (resident)
            pl.BlockSpec((2, HW), lambda n: (0, 0)),            # column masks
            pl.BlockSpec((Cout, 1), lambda n: (0, 0)),          # gamma
            pl.BlockSpec((Cout, 1), lambda n: (0, 0)),          # beta
        ],
        # Constant index map => output stays resident in VMEM across the
        # whole (arbitrary) batch axis and is written to HBM exactly once.
        out_specs=pl.BlockSpec((N, Cout, HW), lambda n: (0, 0, 0)),
        scratch_shapes=[
            pltpu.VMEM((Cout, 1), jnp.float32),   # per-channel sum
            pltpu.VMEM((Cout, 1), jnp.float32),   # per-channel sum of squares
        ],
        compiler_params=pltpu.CompilerParams(
            dimension_semantics=("arbitrary",)),
    )(xpad, wtaps, masks,
      gamma.reshape(Cout, 1).astype(jnp.float32),
      beta.reshape(Cout, 1).astype(jnp.float32))

    # (N, Cout, H*W) -> (N, Cout, H, W): pure metadata reshape, no transpose.
    return out.reshape(N, Cout, H, W)


def _reference(x_nchw, w_oihw, gamma, beta, eps=1e-5):
    """Pure-JAX reference matching torch: conv -> train-mode BN -> ReLU."""
    x = jnp.transpose(x_nchw, (0, 2, 3, 1))
    w = jnp.transpose(w_oihw, (2, 3, 1, 0))
    conv = lax.conv_general_dilated(
        x, w, window_strides=(1, 1), padding="SAME",
        dimension_numbers=("NHWC", "HWIO", "NHWC"),
        precision=lax.Precision.HIGHEST)
    mean = jnp.mean(conv, axis=(0, 1, 2))
    var = jnp.mean(jnp.square(conv - mean), axis=(0, 1, 2))
    y = (conv - mean) * lax.rsqrt(var + eps) * gamma + beta
    return jnp.transpose(jnp.maximum(y, 0.0), (0, 3, 1, 2))


if __name__ == "__main__":
    # Small shapes consistent with the module: NCHW input, 3x3 conv weight.
    N, Cin, Cout, H, W = 2, 4, 8, 16, 16

    key = jax.random.PRNGKey(0)
    kx, kw = jax.random.split(key)
    x = jax.random.normal(kx, (N, Cin, H, W), dtype=jnp.float32)
    # Conv2d weight shape (out_ch, in_ch, 3, 3), bias=False.
    w = 0.1 * jax.random.normal(kw, (Cout, Cin, 3, 3), dtype=jnp.float32)
    # BatchNorm2d default init: weight=1, bias=0.
    gamma = jnp.ones((Cout,), dtype=jnp.float32)
    beta = jnp.zeros((Cout,), dtype=jnp.float32)

    out = conv3x3_forward(x, w, gamma, beta)
    jax.block_until_ready(out)

    ref = _reference(x, w, gamma, beta)
    assert out.shape == (N, Cout, H, W)
    assert jnp.allclose(out, ref, atol=1e-4, rtol=1e-4), "mismatch vs reference"

    print("KERNEL_OK")
</pallas_src>

<mosaic_0001>
module attributes {stable_mosaic.version = 11 : i64} {
  func.func @kernel(%arg0: i32, %arg1: memref<1x4x290xf32, #tpu.memory_space<vmem>>, %arg2: memref<9x8x4xf32, #tpu.memory_space<vmem>>, %arg3: memref<2x256xf32, #tpu.memory_space<vmem>>, %arg4: memref<8x1xf32, #tpu.memory_space<vmem>>, %arg5: memref<8x1xf32, #tpu.memory_space<vmem>>, %arg6: memref<2x8x256xf32, #tpu.memory_space<vmem>>, %arg7: memref<8x1xf32, #tpu.memory_space<vmem>>, %arg8: memref<8x1xf32, #tpu.memory_space<vmem>>) attributes {dimension_semantics = [#tpu.dimension_semantics<arbitrary>], iteration_bounds = array<i64: 2>, scalar_prefetch = 0 : i64, scratch_operands = 2 : i64, tpu.core_type = #tpu.core_type<tc>, window_params = [{transform_indices = @transform_0, window_bounds = array<i64: 1, 4, 290>}, {pipeline_mode = #tpu.pipeline_mode<synchronous>, transform_indices = @transform_1, window_bounds = array<i64: 9, 8, 4>}, {pipeline_mode = #tpu.pipeline_mode<synchronous>, transform_indices = @transform_2, window_bounds = array<i64: 2, 256>}, {pipeline_mode = #tpu.pipeline_mode<synchronous>, transform_indices = @transform_3, window_bounds = array<i64: 8, 1>}, {pipeline_mode = #tpu.pipeline_mode<synchronous>, transform_indices = @transform_4, window_bounds = array<i64: 8, 1>}, {pipeline_mode = #tpu.pipeline_mode<synchronous>, transform_indices = @transform_5, window_bounds = array<i64: 2, 8, 256>}]} {
    %c0_i32 = arith.constant 0 : i32
    %0 = arith.cmpi eq, %arg0, %c0_i32 : i32
    %1 = arith.extui %0 : i1 to i32
    %c0_i32_0 = arith.constant 0 : i32
    %2 = arith.cmpi ne, %1, %c0_i32_0 : i32
    scf.if %2 {
      %cst_66 = arith.constant 0.000000e+00 : f32
      %90 = vector.broadcast %cst_66 : f32 to vector<8x1xf32>
      %c0_67 = arith.constant 0 : index
      %c0_68 = arith.constant 0 : index
      %91 = vector.load %arg7[%c0_67, %c0_68] : memref<8x1xf32, #tpu.memory_space<vmem>>, vector<8x1xf32>
      tpu.vector_store %arg7[%c0_67, %c0_68], %90 {strides = array<i32>} : memref<8x1xf32, #tpu.memory_space<vmem>>, vector<8x1xf32>,
      %cst_69 = arith.constant 0.000000e+00 : f32
      %92 = vector.broadcast %cst_69 : f32 to vector<8x1xf32>
      %c0_70 = arith.constant 0 : index
      %c0_71 = arith.constant 0 : index
      %93 = vector.load %arg8[%c0_70, %c0_71] : memref<8x1xf32, #tpu.memory_space<vmem>>, vector<8x1xf32>
      tpu.vector_store %arg8[%c0_70, %c0_71], %92 {strides = array<i32>} : memref<8x1xf32, #tpu.memory_space<vmem>>, vector<8x1xf32>,
    } else {
    }
    %c0 = arith.constant 0 : index
    %c0_1 = arith.constant 0 : index
    %3 = vector.load %arg3[%c0, %c0_1] : memref<2x256xf32, #tpu.memory_space<vmem>>, vector<1x256xf32>
    %c1 = arith.constant 1 : index
    %c0_2 = arith.constant 0 : index
    %4 = vector.load %arg3[%c1, %c0_2] : memref<2x256xf32, #tpu.memory_space<vmem>>, vector<1x256xf32>
    %cst = arith.constant 0.000000e+00 : f32
    %5 = vector.broadcast %cst : f32 to vector<8x256xf32>
    %c0_3 = arith.constant 0 : index
    %c0_4 = arith.constant 0 : index
    %c0_5 = arith.constant 0 : index
    %6 = vector.load %arg1[%c0_3, %c0_4, %c0_5] : memref<1x4x290xf32, #tpu.memory_space<vmem>>, vector<1x4x256xf32>
    %7 = vector.shape_cast %6 : vector<1x4x256xf32> to vector<4x256xf32>
    %8 = vector.broadcast %3 : vector<1x256xf32> to vector<4x256xf32>
    %9 = arith.mulf %7, %8 : vector<4x256xf32>
    %c0_6 = arith.constant 0 : index
    %c0_7 = arith.constant 0 : index
    %c0_8 = arith.constant 0 : index
    %10 = vector.load %arg2[%c0_6, %c0_7, %c0_8] : memref<9x8x4xf32, #tpu.memory_space<vmem>>, vector<1x8x4xf32>
    %11 = vector.shape_cast %10 : vector<1x8x4xf32> to vector<8x4xf32>
    %cst_9 = arith.constant dense<0.000000e+00> : vector<8x256xf32>
    %12 = tpu.matmul %11, %9, %cst_9 {dimension_numbers = #tpu.dot_dimension_numbers<[1], [0], [0], [1], [0, 0, 1, 1], [], []>} : vector<8x4xf32>, vector<4x256xf32>, vector<8x256xf32> -> vector<8x256xf32>
    %13 = arith.addf %5, %12 : vector<8x256xf32>
    %c0_10 = arith.constant 0 : index
    %c0_11 = arith.constant 0 : index
    %c1_12 = arith.constant 1 : index
    %14 = vector.load %arg1[%c0_10, %c0_11, %c1_12] : memref<1x4x290xf32, #tpu.memory_space<vmem>>, vector<1x4x256xf32>
    %15 = vector.shape_cast %14 : vector<1x4x256xf32> to vector<4x256xf32>
    %c1_13 = arith.constant 1 : index
    %c0_14 = arith.constant 0 : index
    %c0_15 = arith.constant 0 : index
    %16 = vector.load %arg2[%c1_13, %c0_14, %c0_15] : memref<9x8x4xf32, #tpu.memory_space<vmem>>, vector<1x8x4xf32>
    %17 = vector.shape_cast %16 : vector<1x8x4xf32> to vector<8x4xf32>
    %cst_16 = arith.constant dense<0.000000e+00> : vector<8x256xf32>
    %18 = tpu.matmul %17, %15, %cst_16 {dimension_numbers = #tpu.dot_dimension_numbers<[1], [0], [0], [1], [0, 0, 1, 1], [], []>} : vector<8x4xf32>, vector<4x256xf32>, vector<8x256xf32> -> vector<8x256xf32>
    %19 = arith.addf %13, %18 : vector<8x256xf32>
    %c0_17 = arith.constant 0 : index
    %c0_18 = arith.constant 0 : index
    %c2 = arith.constant 2 : index
    %20 = vector.load %arg1[%c0_17, %c0_18, %c2] : memref<1x4x290xf32, #tpu.memory_space<vmem>>, vector<1x4x256xf32>
    %21 = vector.shape_cast %20 : vector<1x4x256xf32> to vector<4x256xf32>
    %22 = vector.broadcast %4 : vector<1x256xf32> to vector<4x256xf32>
    %23 = arith.mulf %21, %22 : vector<4x256xf32>
    %c2_19 = arith.constant 2 : index
    %c0_20 = arith.constant 0 : index
    %c0_21 = arith.constant 0 : index
    %24 = vector.load %arg2[%c2_19, %c0_20, %c0_21] : memref<9x8x4xf32, #tpu.memory_space<vmem>>, vector<1x8x4xf32>
    %25 = vector.shape_cast %24 : vector<1x8x4xf32> to vector<8x4xf32>
    %cst_22 = arith.constant dense<0.000000e+00> : vector<8x256xf32>
    %26 = tpu.matmul %25, %23, %cst_22 {dimension_numbers = #tpu.dot_dimension_numbers<[1], [0], [0], [1], [0, 0, 1, 1], [], []>} : vector<8x4xf32>, vector<4x256xf32>, vector<8x256xf32> -> vector<8x256xf32>
    %27 = arith.addf %19, %26 : vector<8x256xf32>
    %c0_23 = arith.constant 0 : index
    %c0_24 = arith.constant 0 : index
    %c16 = arith.constant 16 : index
    %28 = vector.load %arg1[%c0_23, %c0_24, %c16] : memref<1x4x290xf32, #tpu.memory_space<vmem>>, vector<1x4x256xf32>
    %29 = vector.shape_cast %28 : vector<1x4x256xf32> to vector<4x256xf32>
    %30 = vector.broadcast %3 : vector<1x256xf32> to vector<4x256xf32>
    %31 = arith.mulf %29, %30 : vector<4x256xf32>
    %c3 = arith.constant 3 : index
    %c0_25 = arith.constant 0 : index
    %c0_26 = arith.constant 0 : index
    %32 = vector.load %arg2[%c3, %c0_25, %c0_26] : memref<9x8x4xf32, #tpu.memory_space<vmem>>, vector<1x8x4xf32>
    %33 = vector.shape_cast %32 : vector<1x8x4xf32> to vector<8x4xf32>
    %cst_27 = arith.constant dense<0.000000e+00> : vector<8x256xf32>
    %34 = tpu.matmul %33, %31, %cst_27 {dimension_numbers = #tpu.dot_dimension_numbers<[1], [0], [0], [1], [0, 0, 1, 1], [], []>} : vector<8x4xf32>, vector<4x256xf32>, vector<8x256xf32> -> vector<8x256xf32>
    %35 = arith.addf %27, %34 : vector<8x256xf32>
    %c0_28 = arith.constant 0 : index
    %c0_29 = arith.constant 0 : index
    %c17 = arith.constant 17 : index
    %36 = vector.load %arg1[%c0_28, %c0_29, %c17] : memref<1x4x290xf32, #tpu.memory_space<vmem>>, vector<1x4x256xf32>
    %37 = vector.shape_cast %36 : vector<1x4x256xf32> to vector<4x256xf32>
    %c4 = arith.constant 4 : index
    %c0_30 = arith.constant 0 : index
    %c0_31 = arith.constant 0 : index
    %38 = vector.load %arg2[%c4, %c0_30, %c0_31] : memref<9x8x4xf32, #tpu.memory_space<vmem>>, vector<1x8x4xf32>
    %39 = vector.shape_cast %38 : vector<1x8x4xf32> to vector<8x4xf32>
    %cst_32 = arith.constant dense<0.000000e+00> : vector<8x256xf32>
    %40 = tpu.matmul %39, %37, %cst_32 {dimension_numbers = #tpu.dot_dimension_numbers<[1], [0], [0], [1], [0, 0, 1, 1], [], []>} : vector<8x4xf32>, vector<4x256xf32>, vector<8x256xf32> -> vector<8x256xf32>
    %41 = arith.addf %35, %40 : vector<8x256xf32>
    %c0_33 = arith.constant 0 : index
    %c0_34 = arith.constant 0 : index
    %c18 = arith.constant 18 : index
    %42 = vector.load %arg1[%c0_33, %c0_34, %c18] : memref<1x4x290xf32, #tpu.memory_space<vmem>>, vector<1x4x256xf32>
    %43 = vector.shape_cast %42 : vector<1x4x256xf32> to vector<4x256xf32>
    %44 = vector.broadcast %4 : vector<1x256xf32> to vector<4x256xf32>
    %45 = arith.mulf %43, %44 : vector<4x256xf32>
    %c5 = arith.constant 5 : index
    %c0_35 = arith.constant 0 : index
    %c0_36 = arith.constant 0 : index
    %46 = vector.load %arg2[%c5, %c0_35, %c0_36] : memref<9x8x4xf32, #tpu.memory_space<vmem>>, vector<1x8x4xf32>
    %47 = vector.shape_cast %46 : vector<1x8x4xf32> to vector<8x4xf32>
    %cst_37 = arith.constant dense<0.000000e+00> : vector<8x256xf32>
    %48 = tpu.matmul %47, %45, %cst_37 {dimension_numbers = #tpu.dot_dimension_numbers<[1], [0], [0], [1], [0, 0, 1, 1], [], []>} : vector<8x4xf32>, vector<4x256xf32>, vector<8x256xf32> -> vector<8x256xf32>
    %49 = arith.addf %41, %48 : vector<8x256xf32>
    %c0_38 = arith.constant 0 : index
    %c0_39 = arith.constant 0 : index
    %c32 = arith.constant 32 : index
    %50 = vector.load %arg1[%c0_38, %c0_39, %c32] : memref<1x4x290xf32, #tpu.memory_space<vmem>>, vector<1x4x256xf32>
    %51 = vector.shape_cast %50 : vector<1x4x256xf32> to vector<4x256xf32>
    %52 = vector.broadcast %3 : vector<1x256xf32> to vector<4x256xf32>
    %53 = arith.mulf %51, %52 : vector<4x256xf32>
    %c6 = arith.constant 6 : index
    %c0_40 = arith.constant 0 : index
    %c0_41 = arith.constant 0 : index
    %54 = vector.load %arg2[%c6, %c0_40, %c0_41] : memref<9x8x4xf32, #tpu.memory_space<vmem>>, vector<1x8x4xf32>
    %55 = vector.shape_cast %54 : vector<1x8x4xf32> to vector<8x4xf32>
    %cst_42 = arith.constant dense<0.000000e+00> : vector<8x256xf32>
    %56 = tpu.matmul %55, %53, %cst_42 {dimension_numbers = #tpu.dot_dimension_numbers<[1], [0], [0], [1], [0, 0, 1, 1], [], []>} : vector<8x4xf32>, vector<4x256xf32>, vector<8x256xf32> -> vector<8x256xf32>
    %57 = arith.addf %49, %56 : vector<8x256xf32>
    %c0_43 = arith.constant 0 : index
    %c0_44 = arith.constant 0 : index
    %c33 = arith.constant 33 : index
    %58 = vector.load %arg1[%c0_43, %c0_44, %c33] : memref<1x4x290xf32, #tpu.memory_space<vmem>>, vector<1x4x256xf32>
    %59 = vector.shape_cast %58 : vector<1x4x256xf32> to vector<4x256xf32>
    %c7 = arith.constant 7 : index
    %c0_45 = arith.constant 0 : index
    %c0_46 = arith.constant 0 : index
    %60 = vector.load %arg2[%c7, %c0_45, %c0_46] : memref<9x8x4xf32, #tpu.memory_space<vmem>>, vector<1x8x4xf32>
    %61 = vector.shape_cast %60 : vector<1x8x4xf32> to vector<8x4xf32>
    %cst_47 = arith.constant dense<0.000000e+00> : vector<8x256xf32>
    %62 = tpu.matmul %61, %59, %cst_47 {dimension_numbers = #tpu.dot_dimension_numbers<[1], [0], [0], [1], [0, 0, 1, 1], [], []>} : vector<8x4xf32>, vector<4x256xf32>, vector<8x256xf32> -> vector<8x256xf32>
    %63 = arith.addf %57, %62 : vector<8x256xf32>
    %c0_48 = arith.constant 0 : index
    %c0_49 = arith.constant 0 : index
    %c34 = arith.constant 34 : index
    %64 = vector.load %arg1[%c0_48, %c0_49, %c34] : memref<1x4x290xf32, #tpu.memory_space<vmem>>, vector<1x4x256xf32>
    %65 = vector.shape_cast %64 : vector<1x4x256xf32> to vector<4x256xf32>
    %66 = vector.broadcast %4 : vector<1x256xf32> to vector<4x256xf32>
    %67 = arith.mulf %65, %66 : vector<4x256xf32>
    %c8 = arith.constant 8 : index
    %c0_50 = arith.constant 0 : index
    %c0_51 = arith.constant 0 : index
    %68 = vector.load %arg2[%c8, %c0_50, %c0_51] : memref<9x8x4xf32, #tpu.memory_space<vmem>>, vector<1x8x4xf32>
    %69 = vector.shape_cast %68 : vector<1x8x4xf32> to vector<8x4xf32>
    %cst_52 = arith.constant dense<0.000000e+00> : vector<8x256xf32>
    %70 = tpu.matmul %69, %67, %cst_52 {dimension_numbers = #tpu.dot_dimension_numbers<[1], [0], [0], [1], [0, 0, 1, 1], [], []>} : vector<8x4xf32>, vector<4x256xf32>, vector<8x256xf32> -> vector<8x256xf32>
    %71 = arith.addf %63, %70 : vector<8x256xf32>
    %72 = arith.index_cast %arg0 : i32 to index
    %c0_53 = arith.constant 0 : index
    %c0_54 = arith.constant 0 : index
    %73 = vector.load %arg6[%72, %c0_53, %c0_54] : memref<2x8x256xf32, #tpu.memory_space<vmem>>, vector<1x8x256xf32>
    %74 = vector.shape_cast %73 : vector<1x8x256xf32> to vector<8x256xf32>
    %75 = vector.shape_cast %71 : vector<8x256xf32> to vector<1x8x256xf32>
    tpu.vector_store %arg6[%72, %c0_53, %c0_54], %75 {strides = array<i32>} : memref<2x8x256xf32, #tpu.memory_space<vmem>>, vector<1x8x256xf32>,
    %c0_55 = arith.constant 0 : index
    %c0_56 = arith.constant 0 : index
    %76 = vector.load %arg7[%c0_55, %c0_56] : memref<8x1xf32, #tpu.memory_space<vmem>>, vector<8x1xf32>
    %cst_57 = arith.constant dense<0.000000e+00> : vector<8xf32>
    %77 = vector.multi_reduction <add>, %71, %cst_57 [1] : vector<8x256xf32> to vector<8xf32>
    %78 = vector.shape_cast %77 : vector<8xf32> to vector<8x1xf32>
    %79 = arith.addf %76, %78 : vector<8x1xf32>
    %c0_58 = arith.constant 0 : index
    %c0_59 = arith.constant 0 : index
    %80 = vector.load %arg7[%c0_58, %c0_59] : memref<8x1xf32, #tpu.memory_space<vmem>>, vector<8x1xf32>
    tpu.vector_store %arg7[%c0_58, %c0_59], %79 {strides = array<i32>} : memref<8x1xf32, #tpu.memory_space<vmem>>, vector<8x1xf32>,
    %c0_60 = arith.constant 0 : index
    %c0_61 = arith.constant 0 : index
    %81 = vector.load %arg8[%c0_60, %c0_61] : memref<8x1xf32, #tpu.memory_space<vmem>>, vector<8x1xf32>
    %82 = arith.mulf %71, %71 : vector<8x256xf32>
    %cst_62 = arith.constant dense<0.000000e+00> : vector<8xf32>
    %83 = vector.multi_reduction <add>, %82, %cst_62 [1] : vector<8x256xf32> to vector<8xf32>
    %84 = vector.shape_cast %83 : vector<8xf32> to vector<8x1xf32>
    %85 = arith.addf %81, %84 : vector<8x1xf32>
    %c0_63 = arith.constant 0 : index
    %c0_64 = arith.constant 0 : index
    %86 = vector.load %arg8[%c0_63, %c0_64] : memref<8x1xf32, #tpu.memory_space<vmem>>, vector<8x1xf32>
    tpu.vector_store %arg8[%c0_63, %c0_64], %85 {strides = array<i32>} : memref<8x1xf32, #tpu.memory_space<vmem>>, vector<8x1xf32>,
    %c1_i32 = arith.constant 1 : i32
    %87 = arith.cmpi eq, %arg0, %c1_i32 : i32
    %88 = arith.extui %87 : i1 to i32
    %c0_i32_65 = arith.constant 0 : i32
    %89 = arith.cmpi ne, %88, %c0_i32_65 : i32
    scf.if %89 {
      %c0_66 = arith.constant 0 : index
      %c0_67 = arith.constant 0 : index
      %90 = vector.load %arg7[%c0_66, %c0_67] : memref<8x1xf32, #tpu.memory_space<vmem>>, vector<8x1xf32>
      %cst_68 = arith.constant 0.001953125 : f32
      %91 = vector.broadcast %cst_68 : f32 to vector<8x1xf32>
      %92 = arith.mulf %90, %91 : vector<8x1xf32>
      %c0_69 = arith.constant 0 : index
      %c0_70 = arith.constant 0 : index
      %93 = vector.load %arg8[%c0_69, %c0_70] : memref<8x1xf32, #tpu.memory_space<vmem>>, vector<8x1xf32>
      %cst_71 = arith.constant 0.001953125 : f32
      %94 = vector.broadcast %cst_71 : f32 to vector<8x1xf32>
      %95 = arith.mulf %93, %94 : vector<8x1xf32>
      %96 = arith.mulf %92, %92 : vector<8x1xf32>
      %97 = arith.subf %95, %96 : vector<8x1xf32>
      %c0_72 = arith.constant 0 : index
      %c0_73 = arith.constant 0 : index
      %98 = vector.load %arg4[%c0_72, %c0_73] : memref<8x1xf32, #tpu.memory_space<vmem>>, vector<8x1xf32>
      %cst_74 = arith.constant 9.99999974E-6 : f32
      %99 = vector.broadcast %cst_74 : f32 to vector<8x1xf32>
      %100 = arith.addf %97, %99 : vector<8x1xf32>
      %101 = math.rsqrt %100 : vector<8x1xf32>
      %102 = arith.mulf %98, %101 : vector<8x1xf32>
      %c0_75 = arith.constant 0 : index
      %c0_76 = arith.constant 0 : index
      %103 = vector.load %arg5[%c0_75, %c0_76] : memref<8x1xf32, #tpu.memory_space<vmem>>, vector<8x1xf32>
      %104 = arith.mulf %92, %102 : vector<8x1xf32>
      %105 = arith.subf %103, %104 : vector<8x1xf32>
      %c0_77 = arith.constant 0 : index
      %c0_78 = arith.constant 0 : index
      %c0_79 = arith.constant 0 : index
      %106 = vector.load %arg6[%c0_77, %c0_78, %c0_79] : memref<2x8x256xf32, #tpu.memory_space<vmem>>, vector<2x8x256xf32>
      %107 = vector.shape_cast %102 : vector<8x1xf32> to vector<1x8x1xf32>
      %108 = vector.broadcast %107 : vector<1x8x1xf32> to vector<2x8x256xf32>
      %109 = arith.mulf %106, %108 : vector<2x8x256xf32>
      %110 = vector.shape_cast %105 : vector<8x1xf32> to vector<1x8x1xf32>
      %111 = vector.broadcast %110 : vector<1x8x1xf32> to vector<2x8x256xf32>
      %112 = arith.addf %109, %111 : vector<2x8x256xf32>
      %cst_80 = arith.constant 0.000000e+00 : f32
      %113 = vector.broadcast %cst_80 : f32 to vector<2x8x256xf32>
      %114 = arith.maximumf %112, %113 : vector<2x8x256xf32>
      %c0_81 = arith.constant 0 : index
      %c0_82 = arith.constant 0 : index
      %c0_83 = arith.constant 0 : index
      %115 = vector.load %arg6[%c0_81, %c0_82, %c0_83] : memref<2x8x256xf32, #tpu.memory_space<vmem>>, vector<2x8x256xf32>
      tpu.vector_store %arg6[%c0_81, %c0_82, %c0_83], %114 {strides = array<i32>} : memref<2x8x256xf32, #tpu.memory_space<vmem>>, vector<2x8x256xf32>,
    } else {
    }
    return
  }
  func.func @transform_0(%arg0: i32) -> (i32, i32, i32) {
    %c0_i32 = arith.constant 0 : i32
    %c0_i32_0 = arith.constant 0 : i32
    %c0_i32_1 = arith.constant 0 : i32
    return %arg0, %c0_i32, %c0_i32_0 : i32, i32, i32
  }
  func.func @transform_1(%arg0: i32) -> (i32, i32, i32) {
    %c0_i32 = arith.constant 0 : i32
    %c0_i32_0 = arith.constant 0 : i32
    %c0_i32_1 = arith.constant 0 : i32
    %c0_i32_2 = arith.constant 0 : i32
    return %c0_i32, %c0_i32_0, %c0_i32_1 : i32, i32, i32
  }
  func.func @transform_2(%arg0: i32) -> (i32, i32) {
    %c0_i32 = arith.constant 0 : i32
    %c0_i32_0 = arith.constant 0 : i32
    %c0_i32_1 = arith.constant 0 : i32
    return %c0_i32, %c0_i32_0 : i32, i32
  }
  func.func @transform_3(%arg0: i32) -> (i32, i32) {
    %c0_i32 = arith.constant 0 : i32
    %c0_i32_0 = arith.constant 0 : i32
    %c0_i32_1 = arith.constant 0 : i32
    return %c0_i32, %c0_i32_0 : i32, i32
  }
  func.func @transform_4(%arg0: i32) -> (i32, i32) {
    %c0_i32 = arith.constant 0 : i32
    %c0_i32_0 = arith.constant 0 : i32
    %c0_i32_1 = arith.constant 0 : i32
    return %c0_i32, %c0_i32_0 : i32, i32
  }
  func.func @transform_5(%arg0: i32) -> (i32, i32, i32) {
    %c0_i32 = arith.constant 0 : i32
    %c0_i32_0 = arith.constant 0 : i32
    %c0_i32_1 = arith.constant 0 : i32
    %c0_i32_2 = arith.constant 0 : i32
    return %c0_i32, %c0_i32_0, %c0_i32_1 : i32, i32, i32
  }
}

</mosaic_0001>

<llo_original>
// kernel: tpu_custom_call.1
$region0: #{tpu_custom_call.1}
  #allocation0 [shape = 'u32[]', space=smem, size = 0x4, offset = 0x4, fixed_abs, tag = 'smem constant byte address 0x4 - core index']
  #allocation1 [shape = 'u32[144,128]{1,0:T(1,128)}', space=vmem, size = 0x12000, scoped, tag = 'internal scratch']
  #allocation2 [shape = 'f32[8,1]{1,0:T(8,128)}', space=vmem, size = 0x1000, scoped, tag = 'scratch operand']
  #allocation3 [shape = 'f32[8,1]{1,0:T(8,128)}', space=vmem, size = 0x1000, scoped, tag = 'scratch operand']
  %s0 = inlined_call_operand.vmem [shape: f32[2,4,290], index: 0, kind: input, shape index: {}]
  %s1 = inlined_call_operand.vmem [shape: f32[9,8,4], index: 1, kind: input, shape index: {}]
  %s2 = inlined_call_operand.vmem [shape: f32[2,256], index: 2, kind: input, shape index: {}]
  %s3 = inlined_call_operand.vmem [shape: f32[8,1], index: 3, kind: input, shape index: {}]
  %s4 = inlined_call_operand.vmem [shape: f32[8,1], index: 4, kind: input, shape index: {}]
  %s5 = inlined_call_operand.hbm [shape: f32[2,8,256], index: 5, kind: output, shape index: {}]
  %s6 = sld [smem:[#allocation0]]
  $region61: #{tpu_custom_call.1} parent=0
    _
  %s8 = ssub.s32 1, %s6
  %s9 = scalar_select 0, %s8, %s6
  $region1: #{tpu_custom_call.1} parent=0
    #allocation4 [shape = 'u8[16384]{0}', space=vmem, size = 0x4000, scoped, tag = 'output window, operand 0, single buffered']
    #allocation5 [shape = 's32[2]{0}', space=sflag, size = 0x8, scoped, tag = 'scoped memory for tpu_custom_call.1']
    %10 = vsyncpa [#allocation5], 0
    loop: start=0, step=1, limit=4
    $region2: #{tpu_custom_call.1} parent=1 // loop_pre_header
      _
    $region3: #{tpu_custom_call.1} parent=1 // loop_header
      %s12 = sphi 0, %s16
      %p13 = scmp.ge.s32.totalorder %s12, 4
      %s22 = sphi 0, %s24
      %s25 = sphi 0, %s22
      %s26 = sphi 0, %s25
      %s42 = sphi 0, %s26
      %s46 = sphi 0, %s46
      %s48 = sphi 0, %s46
      %s49 = sphi 0, %s48
      %s63 = sphi 0, %s49
      %s67 = sphi 0, %s67
      %s69 = sphi 0, %s67
      %s70 = sphi 0, %s69
      %s84 = sphi 0, %s70
      %s88 = sphi 0, %s88
      %s90 = sphi 0, %s88
      %s91 = sphi 0, %s90
      %s105 = sphi 0, %s91
      %s109 = sphi 0, %s109
      %s111 = sphi 0, %s109
      %s112 = sphi 0, %s111
      %s126 = sphi 0, %s112
      %s130 = sphi 0, %s130
      %s132 = sphi 0, %s130
      %s133 = sphi 0, %s132
      %s147 = sphi 0, %s133
    $region4: #{tpu_custom_call.1} parent=1 // loop_header_branch
      %15 = sbr.rel (%p13) target = $region8
    $region5: #{tpu_custom_call.1} parent=1 // loop_body
      %s17 = ssub.s32 %s12, 1
      %s18 = ssub.s32 %s12, 2
      %s19 = sadd.s32 %s12, 1
      %s20 = ssub.s32 %s12, %s19
      %p21 = scmp.eq.s32.totalorder %s20, 0
      %s23 = sadd.s32 %s22, 1
      %s24 = scalar_select %p21, %s22, %s23
      %p27 = pneg %p21
      %p28 = scmp.eq.s32.totalorder %s12, 1
      %p29 = por %p27, %p28
      %p30 = scmp.ne.s32.totalorder %s22, %s25
      %p31 = scmp.eq.s32.totalorder %s12, 0
      %p32 = por %p30, %p31
      %p33 = scmp.ne.s32.totalorder %s22, %s25
      %p34 = scmp.eq.s32.totalorder %s17, 1
      %p35 = por %p33, %p34
      %p36 = scmp.ne.s32.totalorder %s25, %s26
      %p37 = scmp.eq.s32.totalorder %s17, 0
      %p38 = por %p36, %p37
      %p39 = scmp.ne.s32.totalorder %s25, %s26
      %p40 = scmp.eq.s32.totalorder %s18, 1
      %p41 = por %p39, %p40
      %p43 = scmp.ne.s32.totalorder %s26, %s42
      %p44 = scmp.eq.s32.totalorder %s18, 0
      %p45 = por %p43, %p44
      %s47 = sadd.s32 %s46, 1
      %p50 = scmp.eq.s32.totalorder %s12, 1
      %p51 = scmp.ne.s32.totalorder %s46, %s48
      %p52 = scmp.eq.s32.totalorder %s12, 0
      %p53 = por %p51, %p52
      %p54 = scmp.ne.s32.totalorder %s46, %s48
      %p55 = scmp.eq.s32.totalorder %s17, 1
      %p56 = por %p54, %p55
      %p57 = scmp.ne.s32.totalorder %s48, %s49
      %p58 = scmp.eq.s32.totalorder %s17, 0
      %p59 = por %p57, %p58
      %p60 = scmp.ne.s32.totalorder %s48, %s49
      %p61 = scmp.eq.s32.totalorder %s18, 1
      %p62 = por %p60, %p61
      %p64 = scmp.ne.s32.totalorder %s49, %s63
      %p65 = scmp.eq.s32.totalorder %s18, 0
      %p66 = por %p64, %p65
      %s68 = sadd.s32 %s67, 1
      %p71 = scmp.eq.s32.totalorder %s12, 1
      %p72 = scmp.ne.s32.totalorder %s67, %s69
      %p73 = scmp.eq.s32.totalorder %s12, 0
      %p74 = por %p72, %p73
      %p75 = scmp.ne.s32.totalorder %s67, %s69
      %p76 = scmp.eq.s32.totalorder %s17, 1
      %p77 = por %p75, %p76
      %p78 = scmp.ne.s32.totalorder %s69, %s70
      %p79 = scmp.eq.s32.totalorder %s17, 0
      %p80 = por %p78, %p79
      %p81 = scmp.ne.s32.totalorder %s69, %s70
      %p82 = scmp.eq.s32.totalorder %s18, 1
      %p83 = por %p81, %p82
      %p85 = scmp.ne.s32.totalorder %s70, %s84
      %p86 = scmp.eq.s32.totalorder %s18, 0
      %p87 = por %p85, %p86
      %s89 = sadd.s32 %s88, 1
      %p92 = scmp.eq.s32.totalorder %s12, 1
      %p93 = scmp.ne.s32.totalorder %s88, %s90
      %p94 = scmp.eq.s32.totalorder %s12, 0
      %p95 = por %p93, %p94
      %p96 = scmp.ne.s32.totalorder %s88, %s90
      %p97 = scmp.eq.s32.totalorder %s17, 1
      %p98 = por %p96, %p97
      %p99 = scmp.ne.s32.totalorder %s90, %s91
      %p100 = scmp.eq.s32.totalorder %s17, 0
      %p101 = por %p99, %p100
      %p102 = scmp.ne.s32.totalorder %s90, %s91
      %p103 = scmp.eq.s32.totalorder %s18, 1
      %p104 = por %p102, %p103
      %p106 = scmp.ne.s32.totalorder %s91, %s105
      %p107 = scmp.eq.s32.totalorder %s18, 0
      %p108 = por %p106, %p107
      %s110 = sadd.s32 %s109, 1
      %p113 = scmp.eq.s32.totalorder %s12, 1
      %p114 = scmp.ne.s32.totalorder %s109, %s111
      %p115 = scmp.eq.s32.totalorder %s12, 0
      %p116 = por %p114, %p115
      %p117 = scmp.ne.s32.totalorder %s109, %s111
      %p118 = scmp.eq.s32.totalorder %s17, 1
      %p119 = por %p117, %p118
      %p120 = scmp.ne.s32.totalorder %s111, %s112
      %p121 = scmp.eq.s32.totalorder %s17, 0
      %p122 = por %p120, %p121
      %p123 = scmp.ne.s32.totalorder %s111, %s112
      %p124 = scmp.eq.s32.totalorder %s18, 1
      %p125 = por %p123, %p124
      %p127 = scmp.ne.s32.totalorder %s112, %s126
      %p128 = scmp.eq.s32.totalorder %s18, 0
      %p129 = por %p127, %p128
      %s131 = sadd.s32 %s130, 1
      %p134 = scmp.eq.s32.totalorder %s12, 1
      %p135 = scmp.ne.s32.totalorder %s130, %s132
      %p136 = scmp.eq.s32.totalorder %s12, 0
      %p137 = por %p135, %p136
      %p138 = scmp.ne.s32.totalorder %s130, %s132
      %p139 = scmp.eq.s32.totalorder %s17, 1
      %p140 = por %p138, %p139
      %p141 = scmp.ne.s32.totalorder %s132, %s133
      %p142 = scmp.eq.s32.totalorder %s17, 0
      %p143 = por %p141, %p142
      %p144 = scmp.ne.s32.totalorder %s132, %s133
      %p145 = scmp.eq.s32.totalorder %s18, 1
      %p146 = por %p144, %p145
      %p148 = scmp.ne.s32.totalorder %s133, %s147
      %p149 = scmp.eq.s32.totalorder %s18, 0
      %p150 = por %p148, %p149
      %p151 = scmp.le.s32.totalorder 1, %s12
      %p152 = scmp.lt.s32.totalorder %s12, 3
      %p153 = pnand %p151, %p152
      %p154 = pneg %p153
      // Predicated region
      $region9: #{tpu_custom_call.1} parent=5 // pred_check
        _
      $region10: #{tpu_custom_call.1} parent=5 // pred_check_branch
        %156 = sbr.rel (%p153) target = $region12
      $region11: #{tpu_custom_call.1} parent=5 // pred_region
        %s157 = ssub.s32 %s12, 1
        // Predicated region
        $region13: #{tpu_custom_call.1} parent=11 // pred_check
          %p158 = pneg %p59
        $region14: #{tpu_custom_call.1} parent=11 // pred_check_branch
          %160 = sbr.rel (%p158) target = $region16
        $region15: #{tpu_custom_call.1} parent=11 // pred_region
          _
        $region16: #{tpu_custom_call.1} parent=11 // pred_fallthru
          _
        // Predicated region
        $region17: #{tpu_custom_call.1} parent=11 // pred_check
          %p161 = pneg %p80
        $region18: #{tpu_custom_call.1} parent=11 // pred_check_branch
          %163 = sbr.rel (%p161) target = $region20
        $region19: #{tpu_custom_call.1} parent=11 // pred_region
          _
        $region20: #{tpu_custom_call.1} parent=11 // pred_fallthru
          _
        // Predicated region
        $region21: #{tpu_custom_call.1} parent=11 // pred_check
          %p164 = pneg %p101
        $region22: #{tpu_custom_call.1} parent=11 // pred_check_branch
          %166 = sbr.rel (%p164) target = $region24
        $region23: #{tpu_custom_call.1} parent=11 // pred_region
          _
        $region24: #{tpu_custom_call.1} parent=11 // pred_fallthru
          _
        // Predicated region
        $region25: #{tpu_custom_call.1} parent=11 // pred_check
          %p167 = pneg %p122
        $region26: #{tpu_custom_call.1} parent=11 // pred_check_branch
          %169 = sbr.rel (%p167) target = $region28
        $region27: #{tpu_custom_call.1} parent=11 // pred_region
          _
        $region28: #{tpu_custom_call.1} parent=11 // pred_fallthru
          _
      $region12: #{tpu_custom_call.1} parent=5 // pred_fallthru
        _
      %p170 = scmp.lt.s32.totalorder %s12, 2
      // Predicated region
      $region29: #{tpu_custom_call.1} parent=5 // pred_check
        %p171 = pneg %p170
      $region30: #{tpu_custom_call.1} parent=5 // pred_check_branch
        %173 = sbr.rel (%p171) target = $region32
      $region31: #{tpu_custom_call.1} parent=5 // pred_region
        // Predicated region
        $region33: #{tpu_custom_call.1} parent=31 // pred_check
          %p174 = pneg %p32
        $region34: #{tpu_custom_call.1} parent=31 // pred_check_branch
          %176 = sbr.rel (%p174) target = $region36
        $region35: #{tpu_custom_call.1} parent=31 // pred_region
          %p177 = scmp.lt.s32.totalorder %s12, 1
          %s178 = scalar_select %p177, %s12, 1
          %s179 = smul.addr %s178, 3
          %s180 = smul.addr %s179, 4
          %s181 = scalar_lea.vmem %s0, %s180
        $region36: #{tpu_custom_call.1} parent=31 // pred_fallthru
          _
      $region32: #{tpu_custom_call.1} parent=5 // pred_fallthru
        _
      %p182 = scmp.le.s32.totalorder 1, %s12
      %p183 = scmp.lt.s32.totalorder %s12, 3
      %p184 = pnand %p182, %p183
      %p185 = pneg %p184
      // Predicated region
      $region37: #{tpu_custom_call.1} parent=5 // pred_check
        _
      $region38: #{tpu_custom_call.1} parent=5 // pred_check_branch
        %187 = sbr.rel (%p184) target = $region40
      $region39: #{tpu_custom_call.1} parent=5 // pred_region
        %s188 = ssub.s32 %s12, 1
        %p189 = scmp.lt.s32.totalorder %s17, 1
        %s190 = scalar_select %p189, %s17, 1
        %s191 = smul.addr %s190, 3
        %s192 = smul.addr %s191, 4
        %s193 = scalar_lea.vmem %s0, %s192
        %p194 = pneg %p38
        %p195 = pneg %p35
        %p196 = pneg %p59
        %p197 = pneg %p56
        %p198 = pneg %p80
        %p199 = pneg %p77
        %p200 = pneg %p101
        %p201 = pneg %p98
        %p202 = pneg %p122
        %p203 = pneg %p119
        %p204 = pneg %p143
        %p205 = pneg %p140
        %p206 = scmp.lt.s32.totalorder %s17, 1
        %s207 = scalar_select %p206, %s17, 1
        %s208 = smul.addr %s207, 3
        %s209 = smul.addr %s208, 4
        %s210 = scalar_lea.vmem %s0, %s209
        %p211 = scmp.eq.s32.totalorder %s17, 0
        // Predicated region
        $region41: #{tpu_custom_call.1} parent=39 // pred_check
          %p212 = pneg %p211
        $region42: #{tpu_custom_call.1} parent=39 // pred_check_branch
          %214 = sbr.rel (%p212) target = $region44
        $region43: #{tpu_custom_call.1} parent=39 // pred_region
          %vm215 = vcmask 7168
          %216 = vst.msk [vmem:[#allocation2] sm:$0xff] %vm215, 0.0
          %217 = vst.msk [vmem:[#allocation3] sm:$0xff] %vm215, 0.0
        $region44: #{tpu_custom_call.1} parent=39 // pred_fallthru
          _
        %v218 = vld [vmem:[%s2] ss:$2 sm:$0x3]
        %s219 = scalar_lea.vmem %s2, 1
        %v220 = vld [vmem:[%s219] ss:$2 sm:$0x3]
        %v221 = vld [vmem:[%s210] sm:$0xff]
        %v223 = vlaneseq
        %v224 = vshrl.u32 %v223, 7
        %v225 = vsub.s32 0, %v224
        %v226 = vrot.slane %v218, %v225
        %v227 = vlaneseq
        %v228 = vshrl.u32 %v227, 7
        %v229 = vsub.s32 1, %v228
        %v230 = vrot.slane %v218, %v229
        %v231 = vcombine.low %v226, %v230
        %v233 = vmul.f32 %v221, %v231
        %v234 = vld [vmem:[%s1] sm:$0xff]
        %v235 = vld [vmem:[%s210 + $0x8] sm:$0xf]
        %s236 = scalar_lea.vmem %s1, 8
        %v237 = vld [vmem:[%s236] sm:$0xff]
        %v240 = vcombine.high %v221, %v221
        %241 = vrot.lane.b32.xlu0 %v221, 127
        %v242 = vpop.permute.xlu0 %241
        %243 = vrot.lane.b32.xlu0 %v240, 127
        %v244 = vpop.permute.xlu0 %243
        %245 = vrot.lane.b32.xlu0 %v235, 127
        %v246 = vpop.permute.xlu0 %245
        %vm247 = vcmask 1039360
        %v248 = vsel %vm247, %v242, %v244
        %v249 = vsel %vm247, %v244, %v246
        %vm250 = vcmask 31744
        %v252 = vsel %vm250, %v237, 0
        %vm254 = vcmask 1043456
        %v255 = vsel %vm254, %v248, 0
        %v257 = vsel %vm254, %v249, 0
        %259 = vmatprep.subr.mxu0 0.0
        %260 = vmatpush1.msra.mxu0 0.0
        %261 = vmatprep.subr.mxu0 0.0
        %262 = vmatpush1.msra.mxu0 0.0
        %263 = vmatprep.subr.mxu0 0.0
        %264 = vmatpush1.msra.mxu0 0.0
        %265 = vmatprep.subr.mxu0 0.0
        %266 = vmatpush1.msra.mxu0 0.0
        %267 = vmatprep.subr.mxu0 0.0
        %268 = vmatpush1.msra.mxu0 0.0
        %269 = vmatprep.subr.mxu0 0.0
        %270 = vmatpush1.msra.mxu0 0.0
        %271 = vmatprep.subr.mxu0 0.0
        %272 = vmatpush1.msra.mxu0 0.0
        %273 = vmatprep.subr.mxu0 0.0
        %274 = vmatpush1.msra.mxu0 0.0
        %275 = vmatprep.subr.mxu0 0.0
        %276 = vmatpush1.msra.mxu0 0.0
        %277 = vmatprep.subr.mxu0 0.0
        %278 = vmatpush1.msra.mxu0 0.0
        %279 = vmatprep.subr.mxu0 0.0
        %280 = vmatpush1.msra.mxu0 0.0
        %281 = vmatprep.subr.mxu0 0.0
        %282 = vmatpush1.msra.mxu0 0.0
        %283 = vmatprep.subr.mxu0 0.0
        %284 = vmatpush1.msra.mxu0 0.0
        %285 = vmatprep.subr.mxu0 0.0
        %286 = vmatpush1.msra.mxu0 0.0
        %287 = vmatprep.subr.mxu0 0.0
        %288 = vmatpush1.msra.mxu0 0.0
        %289 = vmatprep.subr.mxu0 %v257
        %290 = vmatpush1.msra.mxu0 %v255
        %291 = vmatprep.subr.mxu0 0.0
        %292 = vmatpush2.msra.mxu0 0.0
        %293 = vmatprep.subr.mxu0 0.0
        %294 = vmatpush2.msra.mxu0 0.0
        %295 = vmatprep.subr.mxu0 0.0
        %296 = vmatpush2.msra.mxu0 0.0
        %297 = vmatprep.subr.mxu0 0.0
        %298 = vmatpush2.msra.mxu0 0.0
        %299 = vmatprep.subr.mxu0 0.0
        %300 = vmatpush2.msra.mxu0 0.0
        %301 = vmatprep.subr.mxu0 0.0
        %302 = vmatpush2.msra.mxu0 0.0
        %303 = vmatprep.subr.mxu0 0.0
        %304 = vmatpush2.msra.mxu0 0.0
        %305 = vmatprep.subr.mxu0 0.0
        %306 = vmatpush2.msra.mxu0 0.0
        %307 = vmatprep.subr.mxu0 0.0
        %308 = vmatpush2.msra.mxu0 0.0
        %309 = vmatprep.subr.mxu0 0.0
        %310 = vmatpush2.msra.mxu0 0.0
        %311 = vmatprep.subr.mxu0 0.0
        %312 = vmatpush2.msra.mxu0 0.0
        %313 = vmatprep.subr.mxu0 0.0
        %314 = vmatpush2.msra.mxu0 0.0
        %315 = vmatprep.subr.mxu0 0.0
        %316 = vmatpush2.msra.mxu0 0.0
        %317 = vmatprep.subr.mxu0 0.0
        %318 = vmatpush2.msra.mxu0 0.0
        %319 = vmatprep.subr.mxu0 0.0
        %320 = vmatpush2.msra.mxu0 0.0
        %321 = vmatprep.subr.mxu0 0.0
        %322 = vmatpush2.msra.mxu0 0.0
        %323 = vmatprep.mubr.f32.mxu0 0.0
        %324 = vmatmul.mubr.f32.gmra.mxu0 %v252
        %v325 = vpop.f32.mrf.mxu0
        %v326 = vadd.f32 0.0, %v325
        %v327 = vpop.f32.mrf.mxu0
        %v328 = vadd.f32 0.0, %v327
        %329 = vdwg.mxu0
        %v331 = vcombine.high %v233, %v233
        %v333 = vsel %vm250, %v234, 0
        %v335 = vsel %vm254, %v233, 0
        %v337 = vsel %vm254, %v331, 0
        %339 = vmatprep.subr.mxu0 0.0
        %340 = vmatpush1.msra.mxu0 0.0
        %341 = vmatprep.subr.mxu0 0.0
        %342 = vmatpush1.msra.mxu0 0.0
        %343 = vmatprep.subr.mxu0 0.0
        %344 = vmatpush1.msra.mxu0 0.0
        %345 = vmatprep.subr.mxu0 0.0
        %346 = vmatpush1.msra.mxu0 0.0
        %347 = vmatprep.subr.mxu0 0.0
        %348 = vmatpush1.msra.mxu0 0.0
        %349 = vmatprep.subr.mxu0 0.0
        %350 = vmatpush1.msra.mxu0 0.0
        %351 = vmatprep.subr.mxu0 0.0
        %352 = vmatpush1.msra.mxu0 0.0
        %353 = vmatprep.subr.mxu0 0.0
        %354 = vmatpush1.msra.mxu0 0.0
        %355 = vmatprep.subr.mxu0 0.0
        %356 = vmatpush1.msra.mxu0 0.0
        %357 = vmatprep.subr.mxu0 0.0
        %358 = vmatpush1.msra.mxu0 0.0
        %359 = vmatprep.subr.mxu0 0.0
        %360 = vmatpush1.msra.mxu0 0.0
        %361 = vmatprep.subr.mxu0 0.0
        %362 = vmatpush1.msra.mxu0 0.0
        %363 = vmatprep.subr.mxu0 0.0
        %364 = vmatpush1.msra.mxu0 0.0
        %365 = vmatprep.subr.mxu0 0.0
        %366 = vmatpush1.msra.mxu0 0.0
        %367 = vmatprep.subr.mxu0 0.0
        %368 = vmatpush1.msra.mxu0 0.0
        %369 = vmatprep.subr.mxu0 %v337
        %370 = vmatpush1.msra.mxu0 %v335
        %371 = vmatprep.subr.mxu0 0.0
        %372 = vmatpush2.msra.mxu0 0.0
        %373 = vmatprep.subr.mxu0 0.0
        %374 = vmatpush2.msra.mxu0 0.0
        %375 = vmatprep.subr.mxu0 0.0
        %376 = vmatpush2.msra.mxu0 0.0
        %377 = vmatprep.subr.mxu0 0.0
        %378 = vmatpush2.msra.mxu0 0.0
        %379 = vmatprep.subr.mxu0 0.0
        %380 = vmatpush2.msra.mxu0 0.0
        %381 = vmatprep.subr.mxu0 0.0
        %382 = vmatpush2.msra.mxu0 0.0
        %383 = vmatprep.subr.mxu0 0.0
        %384 = vmatpush2.msra.mxu0 0.0
        %385 = vmatprep.subr.mxu0 0.0
        %386 = vmatpush2.msra.mxu0 0.0
        %387 = vmatprep.subr.mxu0 0.0
        %388 = vmatpush2.msra.mxu0 0.0
        %389 = vmatprep.subr.mxu0 0.0
        %390 = vmatpush2.msra.mxu0 0.0
        %391 = vmatprep.subr.mxu0 0.0
        %392 = vmatpush2.msra.mxu0 0.0
        %393 = vmatprep.subr.mxu0 0.0
        %394 = vmatpush2.msra.mxu0 0.0
        %395 = vmatprep.subr.mxu0 0.0
        %396 = vmatpush2.msra.mxu0 0.0
        %397 = vmatprep.subr.mxu0 0.0
        %398 = vmatpush2.msra.mxu0 0.0
        %399 = vmatprep.subr.mxu0 0.0
        %400 = vmatpush2.msra.mxu0 0.0
        %401 = vmatprep.subr.mxu0 0.0
        %402 = vmatpush2.msra.mxu0 0.0
        %403 = vmatprep.mubr.f32.mxu0 0.0
        %404 = vmatmul.mubr.f32.gmra.mxu0 %v333
        %v405 = vpop.f32.mrf.mxu0
        %v406 = vadd.f32 %v326, %v405
        %v407 = vpop.f32.mrf.mxu0
        %v408 = vadd.f32 %v328, %v407
        %409 = vdwg.mxu0
        %v410 = vld [vmem:[%s210] sm:$0xff]
        %v411 = vld [vmem:[%s210 + $0x8] sm:$0xf]
        %v413 = vlaneseq
        %v414 = vshrl.u32 %v413, 7
        %v415 = vsub.s32 0, %v414
        %v416 = vrot.slane %v220, %v415
        %v417 = vlaneseq
        %v418 = vshrl.u32 %v417, 7
        %v419 = vsub.s32 1, %v418
        %v420 = vrot.slane %v220, %v419
        %v421 = vcombine.low %v416, %v420
        %422 = vrot.lane.b32.xlu0 %v421, 2
        %v423 = vpop.permute.xlu0 %422
        %v424 = vrot.slane %v423, 4
        %vm425 = vcmask 15360
        %v426 = vsel %vm425, %v424, %v423
        %v429 = vmul.f32 %v410, %v426
        %v430 = vmul.f32 %v411, %v424
        %s431 = scalar_lea.vmem %s1, 16
        %v432 = vld [vmem:[%s431] sm:$0xff]
        %v435 = vcombine.high %v429, %v429
        %436 = vrot.lane.b32.xlu0 %v429, 126
        %v437 = vpop.permute.xlu0 %436
        %438 = vrot.lane.b32.xlu0 %v435, 126
        %v439 = vpop.permute.xlu0 %438
        %440 = vrot.lane.b32.xlu0 %v430, 126
        %v441 = vpop.permute.xlu0 %440
        %vm442 = vcmask 1031168
        %v443 = vsel %vm442, %v437, %v439
        %v444 = vsel %vm442, %v439, %v441
        %v446 = vsel %vm250, %v432, 0
        %v448 = vsel %vm254, %v443, 0
        %v450 = vsel %vm254, %v444, 0
        %452 = vmatprep.subr.mxu0 0.0
        %453 = vmatpush1.msra.mxu0 0.0
        %454 = vmatprep.subr.mxu0 0.0
        %455 = vmatpush1.msra.mxu0 0.0
        %456 = vmatprep.subr.mxu0 0.0
        %457 = vmatpush1.msra.mxu0 0.0
        %458 = vmatprep.subr.mxu0 0.0
        %459 = vmatpush1.msra.mxu0 0.0
        %460 = vmatprep.subr.mxu0 0.0
        %461 = vmatpush1.msra.mxu0 0.0
        %462 = vmatprep.subr.mxu0 0.0
        %463 = vmatpush1.msra.mxu0 0.0
        %464 = vmatprep.subr.mxu0 0.0
        %465 = vmatpush1.msra.mxu0 0.0
        %466 = vmatprep.subr.mxu0 0.0
        %467 = vmatpush1.msra.mxu0 0.0
        %468 = vmatprep.subr.mxu0 0.0
        %469 = vmatpush1.msra.mxu0 0.0
        %470 = vmatprep.subr.mxu0 0.0
        %471 = vmatpush1.msra.mxu0 0.0
        %472 = vmatprep.subr.mxu0 0.0
        %473 = vmatpush1.msra.mxu0 0.0
        %474 = vmatprep.subr.mxu0 0.0
        %475 = vmatpush1.msra.mxu0 0.0
        %476 = vmatprep.subr.mxu0 0.0
        %477 = vmatpush1.msra.mxu0 0.0
        %478 = vmatprep.subr.mxu0 0.0
        %479 = vmatpush1.msra.mxu0 0.0
        %480 = vmatprep.subr.mxu0 0.0
        %481 = vmatpush1.msra.mxu0 0.0
        %482 = vmatprep.subr.mxu0 %v450
        %483 = vmatpush1.msra.mxu0 %v448
        %484 = vmatprep.subr.mxu0 0.0
        %485 = vmatpush2.msra.mxu0 0.0
        %486 = vmatprep.subr.mxu0 0.0
        %487 = vmatpush2.msra.mxu0 0.0
        %488 = vmatprep.subr.mxu0 0.0
        %489 = vmatpush2.msra.mxu0 0.0
        %490 = vmatprep.subr.mxu0 0.0
        %491 = vmatpush2.msra.mxu0 0.0
        %492 = vmatprep.subr.mxu0 0.0
        %493 = vmatpush2.msra.mxu0 0.0
        %494 = vmatprep.subr.mxu0 0.0
        %495 = vmatpush2.msra.mxu0 0.0
        %496 = vmatprep.subr.mxu0 0.0
        %497 = vmatpush2.msra.mxu0 0.0
        %498 = vmatprep.subr.mxu0 0.0
        %499 = vmatpush2.msra.mxu0 0.0
        %500 = vmatprep.subr.mxu0 0.0
        %501 = vmatpush2.msra.mxu0 0.0
        %502 = vmatprep.subr.mxu0 0.0
        %503 = vmatpush2.msra.mxu0 0.0
        %504 = vmatprep.subr.mxu0 0.0
        %505 = vmatpush2.msra.mxu0 0.0
        %506 = vmatprep.subr.mxu0 0.0
        %507 = vmatpush2.msra.mxu0 0.0
        %508 = vmatprep.subr.mxu0 0.0
        %509 = vmatpush2.msra.mxu0 0.0
        %510 = vmatprep.subr.mxu0 0.0
        %511 = vmatpush2.msra.mxu0 0.0
        %512 = vmatprep.subr.mxu0 0.0
        %513 = vmatpush2.msra.mxu0 0.0
        %514 = vmatprep.subr.mxu0 0.0
        %515 = vmatpush2.msra.mxu0 0.0
        %516 = vmatprep.mubr.f32.mxu0 0.0
        %517 = vmatmul.mubr.f32.gmra.mxu0 %v446
        %v518 = vpop.f32.mrf.mxu0
        %v519 = vadd.f32 0.0, %v518
        %v520 = vpop.f32.mrf.mxu0
        %v521 = vadd.f32 0.0, %v520
        %522 = vdwg.mxu0
        %v523 = vadd.f32 %v406, %v519
        %v524 = vadd.f32 %v408, %v521
        %v525 = vld [vmem:[%s210] sm:$0xff]
        %v526 = vld [vmem:[%s210 + $0x8] sm:$0xf]
        %527 = vrot.lane.b32.xlu0 %v231, 16
        %v528 = vpop.permute.xlu0 %527
        %v529 = vrot.slane %v528, 4
        %vm530 = vcmask 130048
        %v531 = vsel %vm530, %v529, %v528
        %v534 = vmul.f32 %v525, %v531
        %v535 = vmul.f32 %v526, %v529
        %s536 = scalar_lea.vmem %s1, 24
        %v537 = vld [vmem:[%s536] sm:$0xff]
        %v540 = vcombine.high %v534, %v534
        %541 = vrot.lane.b32.xlu0 %v534, 112
        %v542 = vpop.permute.xlu0 %541
        %543 = vrot.lane.b32.xlu0 %v540, 112
        %v544 = vpop.permute.xlu0 %543
        %545 = vrot.lane.b32.xlu0 %v535, 112
        %v546 = vpop.permute.xlu0 %545
        %vm547 = vcmask 916480
        %v548 = vsel %vm547, %v542, %v544
        %v549 = vsel %vm547, %v544, %v546
        %v551 = vsel %vm250, %v537, 0
        %v553 = vsel %vm254, %v548, 0
        %v555 = vsel %vm254, %v549, 0
        %557 = vmatprep.subr.mxu0 0.0
        %558 = vmatpush1.msra.mxu0 0.0
        %559 = vmatprep.subr.mxu0 0.0
        %560 = vmatpush1.msra.mxu0 0.0
        %561 = vmatprep.subr.mxu0 0.0
        %562 = vmatpush1.msra.mxu0 0.0
        %563 = vmatprep.subr.mxu0 0.0
        %564 = vmatpush1.msra.mxu0 0.0
        %565 = vmatprep.subr.mxu0 0.0
        %566 = vmatpush1.msra.mxu0 0.0
        %567 = vmatprep.subr.mxu0 0.0
        %568 = vmatpush1.msra.mxu0 0.0
        %569 = vmatprep.subr.mxu0 0.0
        %570 = vmatpush1.msra.mxu0 0.0
        %571 = vmatprep.subr.mxu0 0.0
        %572 = vmatpush1.msra.mxu0 0.0
        %573 = vmatprep.subr.mxu0 0.0
        %574 = vmatpush1.msra.mxu0 0.0
        %575 = vmatprep.subr.mxu0 0.0
        %576 = vmatpush1.msra.mxu0 0.0
        %577 = vmatprep.subr.mxu0 0.0
        %578 = vmatpush1.msra.mxu0 0.0
        %579 = vmatprep.subr.mxu0 0.0
        %580 = vmatpush1.msra.mxu0 0.0
        %581 = vmatprep.subr.mxu0 0.0
        %582 = vmatpush1.msra.mxu0 0.0
        %583 = vmatprep.subr.mxu0 0.0
        %584 = vmatpush1.msra.mxu0 0.0
        %585 = vmatprep.subr.mxu0 0.0
        %586 = vmatpush1.msra.mxu0 0.0
        %587 = vmatprep.subr.mxu0 %v555
        %588 = vmatpush1.msra.mxu0 %v553
        %589 = vmatprep.subr.mxu0 0.0
        %590 = vmatpush2.msra.mxu0 0.0
        %591 = vmatprep.subr.mxu0 0.0
        %592 = vmatpush2.msra.mxu0 0.0
        %593 = vmatprep.subr.mxu0 0.0
        %594 = vmatpush2.msra.mxu0 0.0
        %595 = vmatprep.subr.mxu0 0.0
        %596 = vmatpush2.msra.mxu0 0.0
        %597 = vmatprep.subr.mxu0 0.0
        %598 = vmatpush2.msra.mxu0 0.0
        %599 = vmatprep.subr.mxu0 0.0
        %600 = vmatpush2.msra.mxu0 0.0
        %601 = vmatprep.subr.mxu0 0.0
        %602 = vmatpush2.msra.mxu0 0.0
        %603 = vmatprep.subr.mxu0 0.0
        %604 = vmatpush2.msra.mxu0 0.0
        %605 = vmatprep.subr.mxu0 0.0
        %606 = vmatpush2.msra.mxu0 0.0
        %607 = vmatprep.subr.mxu0 0.0
        %608 = vmatpush2.msra.mxu0 0.0
        %609 = vmatprep.subr.mxu0 0.0
        %610 = vmatpush2.msra.mxu0 0.0
        %611 = vmatprep.subr.mxu0 0.0
        %612 = vmatpush2.msra.mxu0 0.0
        %613 = vmatprep.subr.mxu0 0.0
        %614 = vmatpush2.msra.mxu0 0.0
        %615 = vmatprep.subr.mxu0 0.0
        %616 = vmatpush2.msra.mxu0 0.0
        %617 = vmatprep.subr.mxu0 0.0
        %618 = vmatpush2.msra.mxu0 0.0
        %619 = vmatprep.subr.mxu0 0.0
        %620 = vmatpush2.msra.mxu0 0.0
        %621 = vmatprep.mubr.f32.mxu0 0.0
        %622 = vmatmul.mubr.f32.gmra.mxu0 %v551
        %v623 = vpop.f32.mrf.mxu0
        %v624 = vadd.f32 0.0, %v623
        %v625 = vpop.f32.mrf.mxu0
        %v626 = vadd.f32 0.0, %v625
        %627 = vdwg.mxu0
        %v628 = vadd.f32 %v523, %v624
        %v629 = vadd.f32 %v524, %v626
        %v630 = vld [vmem:[%s210] sm:$0xff]
        %v631 = vld [vmem:[%s210 + $0x8] sm:$0xf]
        %s632 = scalar_lea.vmem %s1, 32
        %v633 = vld [vmem:[%s632] sm:$0xff]
        %v636 = vcombine.high %v630, %v630
        %637 = vrot.lane.b32.xlu0 %v630, 111
        %v638 = vpop.permute.xlu0 %637
        %639 = vrot.lane.b32.xlu0 %v636, 111
        %v640 = vpop.permute.xlu0 %639
        %641 = vrot.lane.b32.xlu0 %v631, 111
        %v642 = vpop.permute.xlu0 %641
        %vm643 = vcmask 908288
        %v644 = vsel %vm643, %v638, %v640
        %v645 = vsel %vm643, %v640, %v642
        %v647 = vsel %vm250, %v633, 0
        %v649 = vsel %vm254, %v644, 0
        %v651 = vsel %vm254, %v645, 0
        %653 = vmatprep.subr.mxu0 0.0
        %654 = vmatpush1.msra.mxu0 0.0
        %655 = vmatprep.subr.mxu0 0.0
        %656 = vmatpush1.msra.mxu0 0.0
        %657 = vmatprep.subr.mxu0 0.0
        %658 = vmatpush1.msra.mxu0 0.0
        %659 = vmatprep.subr.mxu0 0.0
        %660 = vmatpush1.msra.mxu0 0.0
        %661 = vmatprep.subr.mxu0 0.0
        %662 = vmatpush1.msra.mxu0 0.0
        %663 = vmatprep.subr.mxu0 0.0
        %664 = vmatpush1.msra.mxu0 0.0
        %665 = vmatprep.subr.mxu0 0.0
        %666 = vmatpush1.msra.mxu0 0.0
        %667 = vmatprep.subr.mxu0 0.0
        %668 = vmatpush1.msra.mxu0 0.0
        %669 = vmatprep.subr.mxu0 0.0
        %670 = vmatpush1.msra.mxu0 0.0
        %671 = vmatprep.subr.mxu0 0.0
        %672 = vmatpush1.msra.mxu0 0.0
        %673 = vmatprep.subr.mxu0 0.0
        %674 = vmatpush1.msra.mxu0 0.0
        %675 = vmatprep.subr.mxu0 0.0
        %676 = vmatpush1.msra.mxu0 0.0
        %677 = vmatprep.subr.mxu0 0.0
        %678 = vmatpush1.msra.mxu0 0.0
        %679 = vmatprep.subr.mxu0 0.0
        %680 = vmatpush1.msra.mxu0 0.0
        %681 = vmatprep.subr.mxu0 0.0
        %682 = vmatpush1.msra.mxu0 0.0
        %683 = vmatprep.subr.mxu0 %v651
        %684 = vmatpush1.msra.mxu0 %v649
        %685 = vmatprep.subr.mxu0 0.0
        %686 = vmatpush2.msra.mxu0 0.0
        %687 = vmatprep.subr.mxu0 0.0
        %688 = vmatpush2.msra.mxu0 0.0
        %689 = vmatprep.subr.mxu0 0.0
        %690 = vmatpush2.msra.mxu0 0.0
        %691 = vmatprep.subr.mxu0 0.0
        %692 = vmatpush2.msra.mxu0 0.0
        %693 = vmatprep.subr.mxu0 0.0
        %694 = vmatpush2.msra.mxu0 0.0
        %695 = vmatprep.subr.mxu0 0.0
        %696 = vmatpush2.msra.mxu0 0.0
        %697 = vmatprep.subr.mxu0 0.0
        %698 = vmatpush2.msra.mxu0 0.0
        %699 = vmatprep.subr.mxu0 0.0
        %700 = vmatpush2.msra.mxu0 0.0
        %701 = vmatprep.subr.mxu0 0.0
        %702 = vmatpush2.msra.mxu0 0.0
        %703 = vmatprep.subr.mxu0 0.0
        %704 = vmatpush2.msra.mxu0 0.0
        %705 = vmatprep.subr.mxu0 0.0
        %706 = vmatpush2.msra.mxu0 0.0
        %707 = vmatprep.subr.mxu0 0.0
        %708 = vmatpush2.msra.mxu0 0.0
        %709 = vmatprep.subr.mxu0 0.0
        %710 = vmatpush2.msra.mxu0 0.0
        %711 = vmatprep.subr.mxu0 0.0
        %712 = vmatpush2.msra.mxu0 0.0
        %713 = vmatprep.subr.mxu0 0.0
        %714 = vmatpush2.msra.mxu0 0.0
        %715 = vmatprep.subr.mxu0 0.0
        %716 = vmatpush2.msra.mxu0 0.0
        %717 = vmatprep.mubr.f32.mxu0 0.0
        %718 = vmatmul.mubr.f32.gmra.mxu0 %v647
        %v719 = vpop.f32.mrf.mxu0
        %v720 = vadd.f32 0.0, %v719
        %v721 = vpop.f32.mrf.mxu0
        %v722 = vadd.f32 0.0, %v721
        %723 = vdwg.mxu0
        %v724 = vadd.f32 %v628, %v720
        %v725 = vadd.f32 %v629, %v722
        %v726 = vld [vmem:[%s210] sm:$0xff]
        %v727 = vld [vmem:[%s210 + $0x8] sm:$0xf]
        %728 = vrot.lane.b32.xlu0 %v421, 18
        %v729 = vpop.permute.xlu0 %728
        %v730 = vrot.slane %v729, 4
        %vm731 = vcmask 146432
        %v732 = vsel %vm731, %v730, %v729
        %v735 = vmul.f32 %v726, %v732
        %v736 = vmul.f32 %v727, %v730
        %s737 = scalar_lea.vmem %s1, 40
        %v738 = vld [vmem:[%s737] sm:$0xff]
        %v741 = vcombine.high %v735, %v735
        %742 = vrot.lane.b32.xlu0 %v735, 110
        %v743 = vpop.permute.xlu0 %742
        %744 = vrot.lane.b32.xlu0 %v741, 110
        %v745 = vpop.permute.xlu0 %744
        %746 = vrot.lane.b32.xlu0 %v736, 110
        %v747 = vpop.permute.xlu0 %746
        %vm748 = vcmask 900096
        %v749 = vsel %vm748, %v743, %v745
        %v750 = vsel %vm748, %v745, %v747
        %v752 = vsel %vm250, %v738, 0
        %v754 = vsel %vm254, %v749, 0
        %v756 = vsel %vm254, %v750, 0
        %758 = vmatprep.subr.mxu0 0.0
        %759 = vmatpush1.msra.mxu0 0.0
        %760 = vmatprep.subr.mxu0 0.0
        %761 = vmatpush1.msra.mxu0 0.0
        %762 = vmatprep.subr.mxu0 0.0
        %763 = vmatpush1.msra.mxu0 0.0
        %764 = vmatprep.subr.mxu0 0.0
        %765 = vmatpush1.msra.mxu0 0.0
        %766 = vmatprep.subr.mxu0 0.0
        %767 = vmatpush1.msra.mxu0 0.0
        %768 = vmatprep.subr.mxu0 0.0
        %769 = vmatpush1.msra.mxu0 0.0
        %770 = vmatprep.subr.mxu0 0.0
        %771 = vmatpush1.msra.mxu0 0.0
        %772 = vmatprep.subr.mxu0 0.0
        %773 = vmatpush1.msra.mxu0 0.0
        %774 = vmatprep.subr.mxu0 0.0
        %775 = vmatpush1.msra.mxu0 0.0
        %776 = vmatprep.subr.mxu0 0.0
        %777 = vmatpush1.msra.mxu0 0.0
        %778 = vmatprep.subr.mxu0 0.0
        %779 = vmatpush1.msra.mxu0 0.0
        %780 = vmatprep.subr.mxu0 0.0
        %781 = vmatpush1.msra.mxu0 0.0
        %782 = vmatprep.subr.mxu0 0.0
        %783 = vmatpush1.msra.mxu0 0.0
        %784 = vmatprep.subr.mxu0 0.0
        %785 = vmatpush1.msra.mxu0 0.0
        %786 = vmatprep.subr.mxu0 0.0
        %787 = vmatpush1.msra.mxu0 0.0
        %788 = vmatprep.subr.mxu0 %v756
        %789 = vmatpush1.msra.mxu0 %v754
        %790 = vmatprep.subr.mxu0 0.0
        %791 = vmatpush2.msra.mxu0 0.0
        %792 = vmatprep.subr.mxu0 0.0
        %793 = vmatpush2.msra.mxu0 0.0
        %794 = vmatprep.subr.mxu0 0.0
        %795 = vmatpush2.msra.mxu0 0.0
        %796 = vmatprep.subr.mxu0 0.0
        %797 = vmatpush2.msra.mxu0 0.0
        %798 = vmatprep.subr.mxu0 0.0
        %799 = vmatpush2.msra.mxu0 0.0
        %800 = vmatprep.subr.mxu0 0.0
        %801 = vmatpush2.msra.mxu0 0.0
        %802 = vmatprep.subr.mxu0 0.0
        %803 = vmatpush2.msra.mxu0 0.0
        %804 = vmatprep.subr.mxu0 0.0
        %805 = vmatpush2.msra.mxu0 0.0
        %806 = vmatprep.subr.mxu0 0.0
        %807 = vmatpush2.msra.mxu0 0.0
        %808 = vmatprep.subr.mxu0 0.0
        %809 = vmatpush2.msra.mxu0 0.0
        %810 = vmatprep.subr.mxu0 0.0
        %811 = vmatpush2.msra.mxu0 0.0
        %812 = vmatprep.subr.mxu0 0.0
        %813 = vmatpush2.msra.mxu0 0.0
        %814 = vmatprep.subr.mxu0 0.0
        %815 = vmatpush2.msra.mxu0 0.0
        %816 = vmatprep.subr.mxu0 0.0
        %817 = vmatpush2.msra.mxu0 0.0
        %818 = vmatprep.subr.mxu0 0.0
        %819 = vmatpush2.msra.mxu0 0.0
        %820 = vmatprep.subr.mxu0 0.0
        %821 = vmatpush2.msra.mxu0 0.0
        %822 = vmatprep.mubr.f32.mxu0 0.0
        %823 = vmatmul.mubr.f32.gmra.mxu0 %v752
        %v824 = vpop.f32.mrf.mxu0
        %v825 = vadd.f32 0.0, %v824
        %v826 = vpop.f32.mrf.mxu0
        %v827 = vadd.f32 0.0, %v826
        %828 = vdwg.mxu0
        %v829 = vadd.f32 %v724, %v825
        %v830 = vadd.f32 %v725, %v827
        %v831 = vld [vmem:[%s210] sm:$0xff]
        %v832 = vld [vmem:[%s210 + $0x8] sm:$0xf]
        %833 = vrot.lane.b32.xlu0 %v231, 32
        %v834 = vpop.permute.xlu0 %833
        %v835 = vrot.slane %v834, 4
        %vm836 = vcmask 261120
        %v837 = vsel %vm836, %v835, %v834
        %v840 = vmul.f32 %v831, %v837
        %v841 = vmul.f32 %v832, %v835
        %s842 = scalar_lea.vmem %s1, 48
        %v843 = vld [vmem:[%s842] sm:$0xff]
        %v846 = vcombine.high %v840, %v840
        %847 = vrot.lane.b32.xlu0 %v840, 96
        %v848 = vpop.permute.xlu0 %847
        %849 = vrot.lane.b32.xlu0 %v846, 96
        %v850 = vpop.permute.xlu0 %849
        %851 = vrot.lane.b32.xlu0 %v841, 96
        %v852 = vpop.permute.xlu0 %851
        %vm853 = vcmask 785408
        %v854 = vsel %vm853, %v848, %v850
        %v855 = vsel %vm853, %v850, %v852
        %v857 = vsel %vm250, %v843, 0
        %v859 = vsel %vm254, %v854, 0
        %v861 = vsel %vm254, %v855, 0
        %863 = vmatprep.subr.mxu0 0.0
        %864 = vmatpush1.msra.mxu0 0.0
        %865 = vmatprep.subr.mxu0 0.0
        %866 = vmatpush1.msra.mxu0 0.0
        %867 = vmatprep.subr.mxu0 0.0
        %868 = vmatpush1.msra.mxu0 0.0
        %869 = vmatprep.subr.mxu0 0.0
        %870 = vmatpush1.msra.mxu0 0.0
        %871 = vmatprep.subr.mxu0 0.0
        %872 = vmatpush1.msra.mxu0 0.0
        %873 = vmatprep.subr.mxu0 0.0
        %874 = vmatpush1.msra.mxu0 0.0
        %875 = vmatprep.subr.mxu0 0.0
        %876 = vmatpush1.msra.mxu0 0.0
        %877 = vmatprep.subr.mxu0 0.0
        %878 = vmatpush1.msra.mxu0 0.0
        %879 = vmatprep.subr.mxu0 0.0
        %880 = vmatpush1.msra.mxu0 0.0
        %881 = vmatprep.subr.mxu0 0.0
        %882 = vmatpush1.msra.mxu0 0.0
        %883 = vmatprep.subr.mxu0 0.0
        %884 = vmatpush1.msra.mxu0 0.0
        %885 = vmatprep.subr.mxu0 0.0
        %886 = vmatpush1.msra.mxu0 0.0
        %887 = vmatprep.subr.mxu0 0.0
        %888 = vmatpush1.msra.mxu0 0.0
        %889 = vmatprep.subr.mxu0 0.0
        %890 = vmatpush1.msra.mxu0 0.0
        %891 = vmatprep.subr.mxu0 0.0
        %892 = vmatpush1.msra.mxu0 0.0
        %893 = vmatprep.subr.mxu0 %v861
        %894 = vmatpush1.msra.mxu0 %v859
        %895 = vmatprep.subr.mxu0 0.0
        %896 = vmatpush2.msra.mxu0 0.0
        %897 = vmatprep.subr.mxu0 0.0
        %898 = vmatpush2.msra.mxu0 0.0
        %899 = vmatprep.subr.mxu0 0.0
        %900 = vmatpush2.msra.mxu0 0.0
        %901 = vmatprep.subr.mxu0 0.0
        %902 = vmatpush2.msra.mxu0 0.0
        %903 = vmatprep.subr.mxu0 0.0
        %904 = vmatpush2.msra.mxu0 0.0
        %905 = vmatprep.subr.mxu0 0.0
        %906 = vmatpush2.msra.mxu0 0.0
        %907 = vmatprep.subr.mxu0 0.0
        %908 = vmatpush2.msra.mxu0 0.0
        %909 = vmatprep.subr.mxu0 0.0
        %910 = vmatpush2.msra.mxu0 0.0
        %911 = vmatprep.subr.mxu0 0.0
        %912 = vmatpush2.msra.mxu0 0.0
        %913 = vmatprep.subr.mxu0 0.0
        %914 = vmatpush2.msra.mxu0 0.0
        %915 = vmatprep.subr.mxu0 0.0
        %916 = vmatpush2.msra.mxu0 0.0
        %917 = vmatprep.subr.mxu0 0.0
        %918 = vmatpush2.msra.mxu0 0.0
        %919 = vmatprep.subr.mxu0 0.0
        %920 = vmatpush2.msra.mxu0 0.0
        %921 = vmatprep.subr.mxu0 0.0
        %922 = vmatpush2.msra.mxu0 0.0
        %923 = vmatprep.subr.mxu0 0.0
        %924 = vmatpush2.msra.mxu0 0.0
        %925 = vmatprep.subr.mxu0 0.0
        %926 = vmatpush2.msra.mxu0 0.0
        %927 = vmatprep.mubr.f32.mxu0 0.0
        %928 = vmatmul.mubr.f32.gmra.mxu0 %v857
        %v929 = vpop.f32.mrf.mxu0
        %v930 = vadd.f32 0.0, %v929
        %v931 = vpop.f32.mrf.mxu0
        %v932 = vadd.f32 0.0, %v931
        %933 = vdwg.mxu0
        %v934 = vadd.f32 %v829, %v930
        %v935 = vadd.f32 %v830, %v932
        %v936 = vld [vmem:[%s210] sm:$0xff]
        %v937 = vld [vmem:[%s210 + $0x8] sm:$0xf]
        %s938 = scalar_lea.vmem %s1, 56
        %v939 = vld [vmem:[%s938] sm:$0xff]
        %v942 = vcombine.high %v936, %v936
        %943 = vrot.lane.b32.xlu0 %v936, 95
        %v944 = vpop.permute.xlu0 %943
        %945 = vrot.lane.b32.xlu0 %v942, 95
        %v946 = vpop.permute.xlu0 %945
        %947 = vrot.lane.b32.xlu0 %v937, 95
        %v948 = vpop.permute.xlu0 %947
        %vm949 = vcmask 777216
        %v950 = vsel %vm949, %v944, %v946
        %v951 = vsel %vm949, %v946, %v948
        %v953 = vsel %vm250, %v939, 0
        %v955 = vsel %vm254, %v950, 0
        %v957 = vsel %vm254, %v951, 0
        %959 = vmatprep.subr.mxu0 0.0
        %960 = vmatpush1.msra.mxu0 0.0
        %961 = vmatprep.subr.mxu0 0.0
        %962 = vmatpush1.msra.mxu0 0.0
        %963 = vmatprep.subr.mxu0 0.0
        %964 = vmatpush1.msra.mxu0 0.0
        %965 = vmatprep.subr.mxu0 0.0
        %966 = vmatpush1.msra.mxu0 0.0
        %967 = vmatprep.subr.mxu0 0.0
        %968 = vmatpush1.msra.mxu0 0.0
        %969 = vmatprep.subr.mxu0 0.0
        %970 = vmatpush1.msra.mxu0 0.0
        %971 = vmatprep.subr.mxu0 0.0
        %972 = vmatpush1.msra.mxu0 0.0
        %973 = vmatprep.subr.mxu0 0.0
        %974 = vmatpush1.msra.mxu0 0.0
        %975 = vmatprep.subr.mxu0 0.0
        %976 = vmatpush1.msra.mxu0 0.0
        %977 = vmatprep.subr.mxu0 0.0
        %978 = vmatpush1.msra.mxu0 0.0
        %979 = vmatprep.subr.mxu0 0.0
        %980 = vmatpush1.msra.mxu0 0.0
        %981 = vmatprep.subr.mxu0 0.0
        %982 = vmatpush1.msra.mxu0 0.0
        %983 = vmatprep.subr.mxu0 0.0
        %984 = vmatpush1.msra.mxu0 0.0
        %985 = vmatprep.subr.mxu0 0.0
        %986 = vmatpush1.msra.mxu0 0.0
        %987 = vmatprep.subr.mxu0 0.0
        %988 = vmatpush1.msra.mxu0 0.0
        %989 = vmatprep.subr.mxu0 %v957
        %990 = vmatpush1.msra.mxu0 %v955
        %991 = vmatprep.subr.mxu0 0.0
        %992 = vmatpush2.msra.mxu0 0.0
        %993 = vmatprep.subr.mxu0 0.0
        %994 = vmatpush2.msra.mxu0 0.0
        %995 = vmatprep.subr.mxu0 0.0
        %996 = vmatpush2.msra.mxu0 0.0
        %997 = vmatprep.subr.mxu0 0.0
        %998 = vmatpush2.msra.mxu0 0.0
        %999 = vmatprep.subr.mxu0 0.0
        %1000 = vmatpush2.msra.mxu0 0.0
        %1001 = vmatprep.subr.mxu0 0.0
        %1002 = vmatpush2.msra.mxu0 0.0
        %1003 = vmatprep.subr.mxu0 0.0
        %1004 = vmatpush2.msra.mxu0 0.0
        %1005 = vmatprep.subr.mxu0 0.0
        %1006 = vmatpush2.msra.mxu0 0.0
        %1007 = vmatprep.subr.mxu0 0.0
        %1008 = vmatpush2.msra.mxu0 0.0
        %1009 = vmatprep.subr.mxu0 0.0
        %1010 = vmatpush2.msra.mxu0 0.0
        %1011 = vmatprep.subr.mxu0 0.0
        %1012 = vmatpush2.msra.mxu0 0.0
        %1013 = vmatprep.subr.mxu0 0.0
        %1014 = vmatpush2.msra.mxu0 0.0
        %1015 = vmatprep.subr.mxu0 0.0
        %1016 = vmatpush2.msra.mxu0 0.0
        %1017 = vmatprep.subr.mxu0 0.0
        %1018 = vmatpush2.msra.mxu0 0.0
        %1019 = vmatprep.subr.mxu0 0.0
        %1020 = vmatpush2.msra.mxu0 0.0
        %1021 = vmatprep.subr.mxu0 0.0
        %1022 = vmatpush2.msra.mxu0 0.0
        %1023 = vmatprep.mubr.f32.mxu0 0.0
        %1024 = vmatmul.mubr.f32.gmra.mxu0 %v953
        %v1025 = vpop.f32.mrf.mxu0
        %v1026 = vadd.f32 0.0, %v1025
        %v1027 = vpop.f32.mrf.mxu0
        %v1028 = vadd.f32 0.0, %v1027
        %1029 = vdwg.mxu0
        %v1030 = vadd.f32 %v934, %v1026
        %v1031 = vadd.f32 %v935, %v1028
        %v1032 = vld [vmem:[%s210] sm:$0xff]
        %v1033 = vld [vmem:[%s210 + $0x8] sm:$0xf]
        %1034 = vrot.lane.b32.xlu0 %v421, 34
        %v1035 = vpop.permute.xlu0 %1034
        %v1036 = vrot.slane %v1035, 4
        %vm1037 = vcmask 277504
        %v1038 = vsel %vm1037, %v1036, %v1035
        %v1041 = vmul.f32 %v1032, %v1038
        %v1042 = vmul.f32 %v1033, %v1036
        %s1043 = scalar_lea.vmem %s1, 64
        %v1044 = vld [vmem:[%s1043] sm:$0xff]
        %v1047 = vcombine.high %v1041, %v1041
        %1048 = vrot.lane.b32.xlu0 %v1041, 94
        %v1049 = vpop.permute.xlu0 %1048
        %1050 = vrot.lane.b32.xlu0 %v1047, 94
        %v1051 = vpop.permute.xlu0 %1050
        %1052 = vrot.lane.b32.xlu0 %v1042, 94
        %v1053 = vpop.permute.xlu0 %1052
        %vm1054 = vcmask 769024
        %v1055 = vsel %vm1054, %v1049, %v1051
        %v1056 = vsel %vm1054, %v1051, %v1053
        %v1058 = vsel %vm250, %v1044, 0
        %v1060 = vsel %vm254, %v1055, 0
        %v1062 = vsel %vm254, %v1056, 0
        %1064 = vmatprep.subr.mxu0 0.0
        %1065 = vmatpush1.msra.mxu0 0.0
        %1066 = vmatprep.subr.mxu0 0.0
        %1067 = vmatpush1.msra.mxu0 0.0
        %1068 = vmatprep.subr.mxu0 0.0
        %1069 = vmatpush1.msra.mxu0 0.0
        %1070 = vmatprep.subr.mxu0 0.0
        %1071 = vmatpush1.msra.mxu0 0.0
        %1072 = vmatprep.subr.mxu0 0.0
        %1073 = vmatpush1.msra.mxu0 0.0
        %1074 = vmatprep.subr.mxu0 0.0
        %1075 = vmatpush1.msra.mxu0 0.0
        %1076 = vmatprep.subr.mxu0 0.0
        %1077 = vmatpush1.msra.mxu0 0.0
        %1078 = vmatprep.subr.mxu0 0.0
        %1079 = vmatpush1.msra.mxu0 0.0
        %1080 = vmatprep.subr.mxu0 0.0
        %1081 = vmatpush1.msra.mxu0 0.0
        %1082 = vmatprep.subr.mxu0 0.0
        %1083 = vmatpush1.msra.mxu0 0.0
        %1084 = vmatprep.subr.mxu0 0.0
        %1085 = vmatpush1.msra.mxu0 0.0
        %1086 = vmatprep.subr.mxu0 0.0
        %1087 = vmatpush1.msra.mxu0 0.0
        %1088 = vmatprep.subr.mxu0 0.0
        %1089 = vmatpush1.msra.mxu0 0.0
        %1090 = vmatprep.subr.mxu0 0.0
        %1091 = vmatpush1.msra.mxu0 0.0
        %1092 = vmatprep.subr.mxu0 0.0
        %1093 = vmatpush1.msra.mxu0 0.0
        %1094 = vmatprep.subr.mxu0 %v1062
        %1095 = vmatpush1.msra.mxu0 %v1060
        %1096 = vmatprep.subr.mxu0 0.0
        %1097 = vmatpush2.msra.mxu0 0.0
        %1098 = vmatprep.subr.mxu0 0.0
        %1099 = vmatpush2.msra.mxu0 0.0
        %1100 = vmatprep.subr.mxu0 0.0
        %1101 = vmatpush2.msra.mxu0 0.0
        %1102 = vmatprep.subr.mxu0 0.0
        %1103 = vmatpush2.msra.mxu0 0.0
        %1104 = vmatprep.subr.mxu0 0.0
        %1105 = vmatpush2.msra.mxu0 0.0
        %1106 = vmatprep.subr.mxu0 0.0
        %1107 = vmatpush2.msra.mxu0 0.0
        %1108 = vmatprep.subr.mxu0 0.0
        %1109 = vmatpush2.msra.mxu0 0.0
        %1110 = vmatprep.subr.mxu0 0.0
        %1111 = vmatpush2.msra.mxu0 0.0
        %1112 = vmatprep.subr.mxu0 0.0
        %1113 = vmatpush2.msra.mxu0 0.0
        %1114 = vmatprep.subr.mxu0 0.0
        %1115 = vmatpush2.msra.mxu0 0.0
        %1116 = vmatprep.subr.mxu0 0.0
        %1117 = vmatpush2.msra.mxu0 0.0
        %1118 = vmatprep.subr.mxu0 0.0
        %1119 = vmatpush2.msra.mxu0 0.0
        %1120 = vmatprep.subr.mxu0 0.0
        %1121 = vmatpush2.msra.mxu0 0.0
        %1122 = vmatprep.subr.mxu0 0.0
        %1123 = vmatpush2.msra.mxu0 0.0
        %1124 = vmatprep.subr.mxu0 0.0
        %1125 = vmatpush2.msra.mxu0 0.0
        %1126 = vmatprep.subr.mxu0 0.0
        %1127 = vmatpush2.msra.mxu0 0.0
        %1128 = vmatprep.mubr.f32.mxu0 0.0
        %1129 = vmatmul.mubr.f32.gmra.mxu0 %v1058
        %v1130 = vpop.f32.mrf.mxu0
        %v1131 = vadd.f32 0.0, %v1130
        %v1132 = vpop.f32.mrf.mxu0
        %v1133 = vadd.f32 0.0, %v1132
        %1134 = vdwg.mxu0
        %v1135 = vadd.f32 %v1030, %v1131
        %v1136 = vadd.f32 %v1031, %v1133
        %s1137 = smul.u32 %s17, 2
        %s1138 = smul.addr %s1137, 8
        %s1139 = scalar_lea.vmem [#allocation4], %s1138
        %1140 = vst [vmem:[%s1139] sm:$0xff] %v1135
        %1141 = vst [vmem:[%s1139 + $0x8] sm:$0xff] %v1136
        %v1142 = vld [vmem:[#allocation2] sm:$0xff]
        %v1143 = vadd.f32 %v1135, %v1136
        %1144 = vadd.xlane.f32.xlu0 %v1143
        %v1145 = vpop.xlane.xlu0 %1144
        %v1146 = vadd.f32 %v1142, %v1145
        %vm1147 = vcmask 7168
        %1148 = vst.msk [vmem:[#allocation2] sm:$0xff] %vm1147, %v1146
        %v1149 = vld [vmem:[#allocation3] sm:$0xff]
        %v1150 = vmul.f32 %v1135, %v1135
        %v1151 = vmul.f32 %v1136, %v1136
        %v1152 = vadd.f32 %v1150, %v1151
        %1153 = vadd.xlane.f32.xlu0 %v1152
        %v1154 = vpop.xlane.xlu0 %1153
        %v1155 = vadd.f32 %v1149, %v1154
        %1156 = vst.msk [vmem:[#allocation3] sm:$0xff] %vm1147, %v1155
        %p1157 = scmp.eq.s32.totalorder %s17, 1
        // Predicated region
        $region45: #{tpu_custom_call.1} parent=39 // pred_check
          %p1158 = pneg %p1157
        $region46: #{tpu_custom_call.1} parent=39 // pred_check_branch
          %1160 = sbr.rel (%p1158) target = $region48
        $region47: #{tpu_custom_call.1} parent=39 // pred_region
          %v1161 = vld [vmem:[#allocation2] sm:$0xff]
          %v1162 = vmul.f32 %v1161, 0.001953125
          %v1163 = vld [vmem:[#allocation3] sm:$0xff]
          %v1164 = vmul.f32 %v1163, 0.001953125
          %v1165 = vmul.f32 %v1162, %v1162
          %v1166 = vsub.f32 %v1164, %v1165
          %v1167 = vld [vmem:[%s3] sm:$0xff]
          %v1168 = vadd.f32 %v1166, 1e-05
          %v1169 = vrsqrt.pop %v1168
          %v1170 = vmul.f32 %v1167, %v1169
          %v1171 = vld [vmem:[%s4] sm:$0xff]
          %v1172 = vmul.f32 %v1162, %v1170
          %v1173 = vsub.f32 %v1171, %v1172
          %v1174 = vld [vmem:[#allocation4] sm:$0xff]
          %v1175 = vld [vmem:[#allocation4 + $0x8] sm:$0xff]
          %v1176 = vld [vmem:[#allocation4 + $0x10] sm:$0xff]
          %v1177 = vld [vmem:[#allocation4 + $0x18] sm:$0xff]
          %1179 = vset.pattern.permute.xlu0 0
          %1180 = vperm.xlu0 %1179, %v1170
          %v1181 = vpop.permute.xlu0 %1180
          %v1183 = vmul.f32 %v1174, %v1181
          %v1184 = vmul.f32 %v1175, %v1181
          %v1185 = vmul.f32 %v1176, %v1181
          %v1186 = vmul.f32 %v1177, %v1181
          %1188 = vset.pattern.permute.xlu0 0
          %1189 = vperm.xlu0 %1188, %v1173
          %v1190 = vpop.permute.xlu0 %1189
          %v1192 = vadd.f32 %v1183, %v1190
          %v1193 = vadd.f32 %v1184, %v1190
          %v1194 = vadd.f32 %v1185, %v1190
          %v1195 = vadd.f32 %v1186, %v1190
          %v1196 = vmax.f32 %v1192, 0.0
          %v1197 = vmax.f32 %v1193, 0.0
          %v1198 = vmax.f32 %v1194, 0.0
          %v1199 = vmax.f32 %v1195, 0.0
          %1200 = vst [vmem:[#allocation4] sm:$0xff] %v1196
          %1201 = vst [vmem:[#allocation4 + $0x8] sm:$0xff] %v1197
          %1202 = vst [vmem:[#allocation4 + $0x10] sm:$0xff] %v1198
          %1203 = vst [vmem:[#allocation4 + $0x18] sm:$0xff] %v1199
        $region48: #{tpu_custom_call.1} parent=39 // pred_fallthru
          _
        // Predicated region
        $region49: #{tpu_custom_call.1} parent=39 // pred_check
          %p1204 = pneg %p140
        $region50: #{tpu_custom_call.1} parent=39 // pred_check_branch
          %1206 = sbr.rel (%p1204) target = $region52
        $region51: #{tpu_custom_call.1} parent=39 // pred_region
          %s1208 = ssub.s32 512, 512
          %1209 = vsyncadd [#allocation5], %s1208
          %s1210 = sshll.u32 [#allocation4], 4
          %s1211 = int_to_ptr.vmem [resolvable:$true] %s1210
          %1216 = dma.vmem_to_hbm [thread:$0]  %s1211, 512, %s5, [#allocation5], 256, 256, 16
        $region52: #{tpu_custom_call.1} parent=39 // pred_fallthru
          _
        // Predicated region
        $region53: #{tpu_custom_call.1} parent=39 // pred_check
          %p1217 = pneg %p140
        $region54: #{tpu_custom_call.1} parent=39 // pred_check_branch
          %1219 = sbr.rel (%p1217) target = $region56
        $region55: #{tpu_custom_call.1} parent=39 // pred_region
          %1220 = dma.done [#allocation5], 512
        $region56: #{tpu_custom_call.1} parent=39 // pred_fallthru
          _
      $region40: #{tpu_custom_call.1} parent=5 // pred_fallthru
        _
      %p1221 = scmp.le.s32.totalorder 2, %s12
      // Predicated region
      $region57: #{tpu_custom_call.1} parent=5 // pred_check
        %p1222 = pneg %p1221
      $region58: #{tpu_custom_call.1} parent=5 // pred_check_branch
        %1224 = sbr.rel (%p1222) target = $region60
      $region59: #{tpu_custom_call.1} parent=5 // pred_region
        %s1225 = ssub.s32 %s12, 2
      $region60: #{tpu_custom_call.1} parent=5 // pred_fallthru
        _
    $region6: #{tpu_custom_call.1} parent=1 // loop_footer
      %s16 = sadd.s32 1, %s12
    $region7: #{tpu_custom_call.1} parent=1 // loop_footer_branch
      %11 = sbr.rel target = $region3
    $region8: #{tpu_custom_call.1} parent=1 // loop_exit
      _
    %1226 = vsyncpa [#allocation5], 1
    %s1227 = scalar_lea.sflag [#allocation5], 1
    %1228 = vsyncpa %s1227, 1

</llo_original>
